<compile_context>
chip_gen: v7x
topology: tpu7x:2x2x1
jax: 0.10.0
libtpu: 0.0.40
codegen_flags: <defaults>
</compile_context>

<pallas_src>
import jax
import jax.numpy as jnp
from jax.experimental import pallas as pl
from jax.experimental.pallas import tpu as pltpu


def _round_up(x, m):
    return ((x + m - 1) // m) * m


# 48 MiB scoped-VMEM request is safe on v7x (64 MiB physical) and on
# v5e/v6e (128 MiB physical) while leaving headroom.
_VMEM_SOFT_CAP = 48 * 1024 * 1024


def _choose_tb(B, tb_req):
    """Pick the batch tile: big enough to amortize per-step overhead, small
    enough for scoped VMEM, >= 2 grid steps when B allows (v7x megacore),
    and sublane (8) aligned."""
    tb_req = max(8, min(int(tb_req), 65536))
    tb = min(tb_req, _round_up(B, 8))          # never bigger than the batch
    if B >= 256:
        # keep at least 2 grid steps so "parallel" can shard across 2 TCs
        tb = min(tb, max(128, _round_up(pl.cdiv(B, 2), 128)))
    return _round_up(tb, 8)


def _mlp_kernel(x_ref, w1_ref, b1_ref, w2_ref, b2_ref, w3_ref, b3_ref, o_ref):
    # Batch lives on the sublane axis; features on lanes.  All compute f32.
    x = x_ref[...]                                                       # [tb, 7]
    h1 = jnp.dot(x, w1_ref[...], preferred_element_type=jnp.float32)    # [tb, 64]
    h1 = jnp.maximum(h1 + b1_ref[...], 0.0)
    h2 = jnp.dot(h1, w2_ref[...], preferred_element_type=jnp.float32)   # [tb, 32]
    h2 = jnp.maximum(h2 + b2_ref[...], 0.0)
    out = jnp.dot(h2, w3_ref[...], preferred_element_type=jnp.float32)  # [tb, 1]
    o_ref[...] = (out + b3_ref[...]).astype(o_ref.dtype)


def simple_mlp_forward(vel, params, *, tb=16384):
    """vel: [B, 7] float32.  params: w_i as [in, out], b_i as [1, out].

    Returns [B, 1] float32 (same semantics as SimpleMLP.forward)."""
    B, F = vel.shape
    w1, b1, w2, b2, w3, b3 = (
        params["w1"], params["b1"], params["w2"],
        params["b2"], params["w3"], params["b3"],
    )
    h1_dim, h2_dim, out_dim = w1.shape[1], w2.shape[1], w3.shape[1]

    tb = _choose_tb(B, tb)
    n_tiles = pl.cdiv(B, tb)   # final tile may be partial; rows are independent,
                               # OOB reads are unused and OOB writes are masked.

    # Per-step VMEM estimate: 2x double-buffered in/out tiles + f32 h1/h2.
    est_vmem = 4 * tb * (2 * F + 2 * out_dim + h1_dim + h2_dim) + 64 * 1024
    vmem_limit = None
    if est_vmem > 12 * 1024 * 1024:            # above the v5e scoped default
        vmem_limit = min(int(est_vmem * 3 // 2), _VMEM_SOFT_CAP)

    weight_bytes = 4 * (F * h1_dim + h1_dim + h1_dim * h2_dim + h2_dim
                        + h2_dim * out_dim + out_dim)
    cost = pl.CostEstimate(
        flops=2 * B * (F * h1_dim + h1_dim * h2_dim + h2_dim * out_dim),
        transcendentals=0,
        bytes_accessed=4 * B * (F + out_dim) + weight_bytes,
    )

    const = lambda shape: pl.BlockSpec(shape, lambda i: (0, 0))

    out = pl.pallas_call(
        _mlp_kernel,
        out_shape=jax.ShapeDtypeStruct((B, out_dim), jnp.float32),
        grid=(n_tiles,),
        in_specs=[
            pl.BlockSpec((tb, F), lambda i: (i, 0)),   # streamed, contiguous tiles
            const(w1.shape), const(b1.shape),          # params stay VMEM-resident
            const(w2.shape), const(b2.shape),
            const(w3.shape), const(b3.shape),
        ],
        out_specs=pl.BlockSpec((tb, out_dim), lambda i: (i, 0)),
        compiler_params=pltpu.CompilerParams(
            dimension_semantics=("parallel",),         # v7x: shard over 2 TCs
            vmem_limit_bytes=vmem_limit),
        cost_estimate=cost,
    )(vel, w1, b1, w2, b2, w3, b3)

    return out


def init_params(key):
    """Deterministic init mimicking PyTorch nn.Linear default
    (uniform +-1/sqrt(fan_in)).  Weights stored [in, out]; biases [1, out]."""
    dims = [(7, 64), (64, 32), (32, 1)]
    params = {}
    for i, (fan_in, fan_out) in enumerate(dims, start=1):
        key, kw, kb = jax.random.split(key, 3)
        bound = 1.0 / (fan_in ** 0.5)
        params[f"w{i}"] = jax.random.uniform(
            kw, (fan_in, fan_out), jnp.float32, minval=-bound, maxval=bound)
        params[f"b{i}"] = jax.random.uniform(
            kb, (1, fan_out), jnp.float32, minval=-bound, maxval=bound)
    return params


def _reference(vel, params):
    h = jnp.maximum(vel @ params["w1"] + params["b1"], 0.0)
    h = jnp.maximum(h @ params["w2"] + params["b2"], 0.0)
    return h @ params["w3"] + params["b3"]


if __name__ == "__main__":
    key = jax.random.PRNGKey(0)
    k_in, k_param = jax.random.split(key)

    # 7 input features = 3 (pos) + 3 (vel) + 1 (extra).  B deliberately not a
    # multiple of the tile so the partial-tile (masked write) path and the
    # 2-step "parallel" grid are both exercised at small scale.
    B = 300
    vel = jax.random.normal(k_in, (B, 7), jnp.float32)
    params = init_params(k_param)

    out = simple_mlp_forward(vel, params)
    out = jax.block_until_ready(out)

    ref = _reference(vel, params)
    assert out.shape == (B, 1)
    assert jnp.allclose(out, ref, atol=1e-5, rtol=1e-5)

    print("KERNEL_OK")
</pallas_src>

<mosaic_0001>
module attributes {stable_mosaic.version = 11 : i64} {
  func.func @_mlp_kernel(%arg0: i32, %arg1: memref<256x7xf32, #tpu.memory_space<vmem>>, %arg2: memref<7x64xf32, #tpu.memory_space<vmem>>, %arg3: memref<1x64xf32, #tpu.memory_space<vmem>>, %arg4: memref<64x32xf32, #tpu.memory_space<vmem>>, %arg5: memref<1x32xf32, #tpu.memory_space<vmem>>, %arg6: memref<32x1xf32, #tpu.memory_space<vmem>>, %arg7: memref<1x1xf32, #tpu.memory_space<vmem>>, %arg8: memref<256x1xf32, #tpu.memory_space<vmem>>) attributes {dimension_semantics = [#tpu.dimension_semantics<parallel>], iteration_bounds = array<i64: 2>, scalar_prefetch = 0 : i64, scratch_operands = 0 : i64, tpu.core_type = #tpu.core_type<tc>, window_params = [{transform_indices = @transform_0, window_bounds = array<i64: 256, 7>}, {pipeline_mode = #tpu.pipeline_mode<synchronous>, transform_indices = @transform_1, window_bounds = array<i64: 7, 64>}, {pipeline_mode = #tpu.pipeline_mode<synchronous>, transform_indices = @transform_2, window_bounds = array<i64: 1, 64>}, {pipeline_mode = #tpu.pipeline_mode<synchronous>, transform_indices = @transform_3, window_bounds = array<i64: 64, 32>}, {pipeline_mode = #tpu.pipeline_mode<synchronous>, transform_indices = @transform_4, window_bounds = array<i64: 1, 32>}, {pipeline_mode = #tpu.pipeline_mode<synchronous>, transform_indices = @transform_5, window_bounds = array<i64: 32, 1>}, {pipeline_mode = #tpu.pipeline_mode<synchronous>, transform_indices = @transform_6, window_bounds = array<i64: 1, 1>}, {transform_indices = @transform_7, window_bounds = array<i64: 256, 1>}]} {
    %c0 = arith.constant 0 : index
    %c0_0 = arith.constant 0 : index
    %0 = vector.load %arg1[%c0, %c0_0] : memref<256x7xf32, #tpu.memory_space<vmem>>, vector<256x7xf32>
    %c0_1 = arith.constant 0 : index
    %c0_2 = arith.constant 0 : index
    %1 = vector.load %arg2[%c0_1, %c0_2] : memref<7x64xf32, #tpu.memory_space<vmem>>, vector<7x64xf32>
    %cst = arith.constant dense<0.000000e+00> : vector<256x64xf32>
    %2 = tpu.matmul %0, %1, %cst {dimension_numbers = #tpu.dot_dimension_numbers<[1], [0], [0], [1], [0, 0, 1, 1], [], []>} : vector<256x7xf32>, vector<7x64xf32>, vector<256x64xf32> -> vector<256x64xf32>
    %c0_3 = arith.constant 0 : index
    %c0_4 = arith.constant 0 : index
    %3 = vector.load %arg3[%c0_3, %c0_4] : memref<1x64xf32, #tpu.memory_space<vmem>>, vector<1x64xf32>
    %4 = vector.broadcast %3 : vector<1x64xf32> to vector<256x64xf32>
    %5 = arith.addf %2, %4 : vector<256x64xf32>
    %cst_5 = arith.constant 0.000000e+00 : f32
    %6 = vector.broadcast %cst_5 : f32 to vector<256x64xf32>
    %7 = arith.maximumf %5, %6 : vector<256x64xf32>
    %c0_6 = arith.constant 0 : index
    %c0_7 = arith.constant 0 : index
    %8 = vector.load %arg4[%c0_6, %c0_7] : memref<64x32xf32, #tpu.memory_space<vmem>>, vector<64x32xf32>
    %cst_8 = arith.constant dense<0.000000e+00> : vector<256x32xf32>
    %9 = tpu.matmul %7, %8, %cst_8 {dimension_numbers = #tpu.dot_dimension_numbers<[1], [0], [0], [1], [0, 0, 1, 1], [], []>} : vector<256x64xf32>, vector<64x32xf32>, vector<256x32xf32> -> vector<256x32xf32>
    %c0_9 = arith.constant 0 : index
    %c0_10 = arith.constant 0 : index
    %10 = vector.load %arg5[%c0_9, %c0_10] : memref<1x32xf32, #tpu.memory_space<vmem>>, vector<1x32xf32>
    %11 = vector.broadcast %10 : vector<1x32xf32> to vector<256x32xf32>
    %12 = arith.addf %9, %11 : vector<256x32xf32>
    %cst_11 = arith.constant 0.000000e+00 : f32
    %13 = vector.broadcast %cst_11 : f32 to vector<256x32xf32>
    %14 = arith.maximumf %12, %13 : vector<256x32xf32>
    %c0_12 = arith.constant 0 : index
    %c0_13 = arith.constant 0 : index
    %15 = vector.load %arg6[%c0_12, %c0_13] : memref<32x1xf32, #tpu.memory_space<vmem>>, vector<32x1xf32>
    %cst_14 = arith.constant dense<0.000000e+00> : vector<256x1xf32>
    %16 = tpu.matmul %14, %15, %cst_14 {dimension_numbers = #tpu.dot_dimension_numbers<[1], [0], [0], [1], [0, 0, 1, 1], [], []>} : vector<256x32xf32>, vector<32x1xf32>, vector<256x1xf32> -> vector<256x1xf32>
    %c0_15 = arith.constant 0 : index
    %c0_16 = arith.constant 0 : index
    %17 = vector.load %arg7[%c0_15, %c0_16] : memref<1x1xf32, #tpu.memory_space<vmem>>, vector<1x1xf32>
    %18 = vector.broadcast %17 : vector<1x1xf32> to vector<256x1xf32>
    %19 = arith.addf %16, %18 : vector<256x1xf32>
    %c0_17 = arith.constant 0 : index
    %c0_18 = arith.constant 0 : index
    %20 = vector.load %arg8[%c0_17, %c0_18] : memref<256x1xf32, #tpu.memory_space<vmem>>, vector<256x1xf32>
    tpu.vector_store %arg8[%c0_17, %c0_18], %19 {strides = array<i32>} : memref<256x1xf32, #tpu.memory_space<vmem>>, vector<256x1xf32>,
    return
  }
  func.func @transform_0(%arg0: i32) -> (i32, i32) {
    %c0_i32 = arith.constant 0 : i32
    %c0_i32_0 = arith.constant 0 : i32
    return %arg0, %c0_i32 : i32, i32
  }
  func.func @transform_1(%arg0: i32) -> (i32, i32) {
    %c0_i32 = arith.constant 0 : i32
    %c0_i32_0 = arith.constant 0 : i32
    %c0_i32_1 = arith.constant 0 : i32
    return %c0_i32, %c0_i32_0 : i32, i32
  }
  func.func @transform_2(%arg0: i32) -> (i32, i32) {
    %c0_i32 = arith.constant 0 : i32
    %c0_i32_0 = arith.constant 0 : i32
    %c0_i32_1 = arith.constant 0 : i32
    return %c0_i32, %c0_i32_0 : i32, i32
  }
  func.func @transform_3(%arg0: i32) -> (i32, i32) {
    %c0_i32 = arith.constant 0 : i32
    %c0_i32_0 = arith.constant 0 : i32
    %c0_i32_1 = arith.constant 0 : i32
    return %c0_i32, %c0_i32_0 : i32, i32
  }
  func.func @transform_4(%arg0: i32) -> (i32, i32) {
    %c0_i32 = arith.constant 0 : i32
    %c0_i32_0 = arith.constant 0 : i32
    %c0_i32_1 = arith.constant 0 : i32
    return %c0_i32, %c0_i32_0 : i32, i32
  }
  func.func @transform_5(%arg0: i32) -> (i32, i32) {
    %c0_i32 = arith.constant 0 : i32
    %c0_i32_0 = arith.constant 0 : i32
    %c0_i32_1 = arith.constant 0 : i32
    return %c0_i32, %c0_i32_0 : i32, i32
  }
  func.func @transform_6(%arg0: i32) -> (i32, i32) {
    %c0_i32 = arith.constant 0 : i32
    %c0_i32_0 = arith.constant 0 : i32
    %c0_i32_1 = arith.constant 0 : i32
    return %c0_i32, %c0_i32_0 : i32, i32
  }
  func.func @transform_7(%arg0: i32) -> (i32, i32) {
    %c0_i32 = arith.constant 0 : i32
    %c0_i32_0 = arith.constant 0 : i32
    return %arg0, %c0_i32 : i32, i32
  }
}

</mosaic_0001>

<llo_original>
// kernel: tpu_custom_call.1
$region0: #{tpu_custom_call.1}
  #allocation0 [shape = 'u32[]', space=smem, size = 0x4, offset = 0x4, fixed_abs, tag = 'smem constant byte address 0x4 - core index']
  #allocation1 [shape = 'u32[144,128]{1,0:T(1,128)}', space=vmem, size = 0x12000, scoped, tag = 'internal scratch']
  #allocation2 [shape = 'f32[1,1]{1,0:T(1,128)S(1)}', space=vmem, size = 0x200, scoped, tag = 'scoped memory for tpu_custom_call.1']
  %s0 = inlined_call_operand.vmem [shape: f32[300,7], index: 0, kind: input, shape index: {}]
  %s1 = inlined_call_operand.vmem [shape: f32[7,64], index: 1, kind: input, shape index: {}]
  %s2 = inlined_call_operand.vmem [shape: f32[1,64], index: 2, kind: input, shape index: {}]
  %s3 = inlined_call_operand.vmem [shape: f32[64,32], index: 3, kind: input, shape index: {}]
  %s4 = inlined_call_operand.vmem [shape: f32[1,32], index: 4, kind: input, shape index: {}]
  %s5 = inlined_call_operand.vmem [shape: f32[32,1], index: 5, kind: input, shape index: {}]
  %s6 = inlined_call_operand.<no memory space> [shape: f32[1,1], index: 6, kind: input, shape index: {}]
  %s7 = inlined_call_operand.vmem [shape: f32[300,1], index: 7, kind: output, shape index: {}]
  %s8 = sld [smem:[#allocation0]]
  $region109: #{tpu_custom_call.1} parent=0
    _
  %s10 = ssub.s32 1, %s8
  %s11 = scalar_select 0, %s10, %s8
  %v12 = vstv %s6
  %13 = vst [vmem:[#allocation2] sm:$0x1] %v12
  $region1: #{tpu_custom_call.1} parent=0
    #allocation3 [shape = 'u8[262144]{0}', space=vmem, size = 0x40000, scoped, tag = 'output window, operand 0']
    loop: start=0, step=1, limit=4
    $region2: #{tpu_custom_call.1} parent=1 // loop_pre_header
      _
    $region3: #{tpu_custom_call.1} parent=1 // loop_header
      %s15 = sphi 0, %s19
      %p16 = scmp.ge.s32.totalorder %s15, 4
      %s25 = sphi 0, %s27
      %s28 = sphi 0, %s25
      %s29 = sphi 0, %s28
      %s45 = sphi 0, %s29
      %s49 = sphi 0, %s49
      %s51 = sphi 0, %s49
      %s52 = sphi 0, %s51
      %s66 = sphi 0, %s52
      %s70 = sphi 0, %s70
      %s72 = sphi 0, %s70
      %s73 = sphi 0, %s72
      %s87 = sphi 0, %s73
      %s91 = sphi 0, %s91
      %s93 = sphi 0, %s91
      %s94 = sphi 0, %s93
      %s108 = sphi 0, %s94
      %s112 = sphi 0, %s112
      %s114 = sphi 0, %s112
      %s115 = sphi 0, %s114
      %s129 = sphi 0, %s115
      %s133 = sphi 0, %s133
      %s135 = sphi 0, %s133
      %s136 = sphi 0, %s135
      %s150 = sphi 0, %s136
      %s154 = sphi 0, %s154
      %s156 = sphi 0, %s154
      %s157 = sphi 0, %s156
      %s171 = sphi 0, %s157
      %s177 = sphi 0, %s179
      %s180 = sphi 0, %s177
      %s181 = sphi 0, %s180
      %s197 = sphi 0, %s181
    $region4: #{tpu_custom_call.1} parent=1 // loop_header_branch
      %18 = sbr.rel (%p16) target = $region8
    $region5: #{tpu_custom_call.1} parent=1 // loop_body
      %s20 = ssub.s32 %s15, 1
      %s21 = ssub.s32 %s15, 2
      %s22 = sadd.s32 %s15, 1
      %s23 = ssub.s32 %s15, %s22
      %p24 = scmp.eq.s32.totalorder %s23, 0
      %s26 = sadd.s32 %s25, 1
      %s27 = scalar_select %p24, %s25, %s26
      %p30 = pneg %p24
      %p31 = scmp.eq.s32.totalorder %s15, 1
      %p32 = por %p30, %p31
      %p33 = scmp.ne.s32.totalorder %s25, %s28
      %p34 = scmp.eq.s32.totalorder %s15, 0
      %p35 = por %p33, %p34
      %p36 = scmp.ne.s32.totalorder %s25, %s28
      %p37 = scmp.eq.s32.totalorder %s20, 1
      %p38 = por %p36, %p37
      %p39 = scmp.ne.s32.totalorder %s28, %s29
      %p40 = scmp.eq.s32.totalorder %s20, 0
      %p41 = por %p39, %p40
      %p42 = scmp.ne.s32.totalorder %s28, %s29
      %p43 = scmp.eq.s32.totalorder %s21, 1
      %p44 = por %p42, %p43
      %p46 = scmp.ne.s32.totalorder %s29, %s45
      %p47 = scmp.eq.s32.totalorder %s21, 0
      %p48 = por %p46, %p47
      %s50 = sadd.s32 %s49, 1
      %p53 = scmp.eq.s32.totalorder %s15, 1
      %p54 = scmp.ne.s32.totalorder %s49, %s51
      %p55 = scmp.eq.s32.totalorder %s15, 0
      %p56 = por %p54, %p55
      %p57 = scmp.ne.s32.totalorder %s49, %s51
      %p58 = scmp.eq.s32.totalorder %s20, 1
      %p59 = por %p57, %p58
      %p60 = scmp.ne.s32.totalorder %s51, %s52
      %p61 = scmp.eq.s32.totalorder %s20, 0
      %p62 = por %p60, %p61
      %p63 = scmp.ne.s32.totalorder %s51, %s52
      %p64 = scmp.eq.s32.totalorder %s21, 1
      %p65 = por %p63, %p64
      %p67 = scmp.ne.s32.totalorder %s52, %s66
      %p68 = scmp.eq.s32.totalorder %s21, 0
      %p69 = por %p67, %p68
      %s71 = sadd.s32 %s70, 1
      %p74 = scmp.eq.s32.totalorder %s15, 1
      %p75 = scmp.ne.s32.totalorder %s70, %s72
      %p76 = scmp.eq.s32.totalorder %s15, 0
      %p77 = por %p75, %p76
      %p78 = scmp.ne.s32.totalorder %s70, %s72
      %p79 = scmp.eq.s32.totalorder %s20, 1
      %p80 = por %p78, %p79
      %p81 = scmp.ne.s32.totalorder %s72, %s73
      %p82 = scmp.eq.s32.totalorder %s20, 0
      %p83 = por %p81, %p82
      %p84 = scmp.ne.s32.totalorder %s72, %s73
      %p85 = scmp.eq.s32.totalorder %s21, 1
      %p86 = por %p84, %p85
      %p88 = scmp.ne.s32.totalorder %s73, %s87
      %p89 = scmp.eq.s32.totalorder %s21, 0
      %p90 = por %p88, %p89
      %s92 = sadd.s32 %s91, 1
      %p95 = scmp.eq.s32.totalorder %s15, 1
      %p96 = scmp.ne.s32.totalorder %s91, %s93
      %p97 = scmp.eq.s32.totalorder %s15, 0
      %p98 = por %p96, %p97
      %p99 = scmp.ne.s32.totalorder %s91, %s93
      %p100 = scmp.eq.s32.totalorder %s20, 1
      %p101 = por %p99, %p100
      %p102 = scmp.ne.s32.totalorder %s93, %s94
      %p103 = scmp.eq.s32.totalorder %s20, 0
      %p104 = por %p102, %p103
      %p105 = scmp.ne.s32.totalorder %s93, %s94
      %p106 = scmp.eq.s32.totalorder %s21, 1
      %p107 = por %p105, %p106
      %p109 = scmp.ne.s32.totalorder %s94, %s108
      %p110 = scmp.eq.s32.totalorder %s21, 0
      %p111 = por %p109, %p110
      %s113 = sadd.s32 %s112, 1
      %p116 = scmp.eq.s32.totalorder %s15, 1
      %p117 = scmp.ne.s32.totalorder %s112, %s114
      %p118 = scmp.eq.s32.totalorder %s15, 0
      %p119 = por %p117, %p118
      %p120 = scmp.ne.s32.totalorder %s112, %s114
      %p121 = scmp.eq.s32.totalorder %s20, 1
      %p122 = por %p120, %p121
      %p123 = scmp.ne.s32.totalorder %s114, %s115
      %p124 = scmp.eq.s32.totalorder %s20, 0
      %p125 = por %p123, %p124
      %p126 = scmp.ne.s32.totalorder %s114, %s115
      %p127 = scmp.eq.s32.totalorder %s21, 1
      %p128 = por %p126, %p127
      %p130 = scmp.ne.s32.totalorder %s115, %s129
      %p131 = scmp.eq.s32.totalorder %s21, 0
      %p132 = por %p130, %p131
      %s134 = sadd.s32 %s133, 1
      %p137 = scmp.eq.s32.totalorder %s15, 1
      %p138 = scmp.ne.s32.totalorder %s133, %s135
      %p139 = scmp.eq.s32.totalorder %s15, 0
      %p140 = por %p138, %p139
      %p141 = scmp.ne.s32.totalorder %s133, %s135
      %p142 = scmp.eq.s32.totalorder %s20, 1
      %p143 = por %p141, %p142
      %p144 = scmp.ne.s32.totalorder %s135, %s136
      %p145 = scmp.eq.s32.totalorder %s20, 0
      %p146 = por %p144, %p145
      %p147 = scmp.ne.s32.totalorder %s135, %s136
      %p148 = scmp.eq.s32.totalorder %s21, 1
      %p149 = por %p147, %p148
      %p151 = scmp.ne.s32.totalorder %s136, %s150
      %p152 = scmp.eq.s32.totalorder %s21, 0
      %p153 = por %p151, %p152
      %s155 = sadd.s32 %s154, 1
      %p158 = scmp.eq.s32.totalorder %s15, 1
      %p159 = scmp.ne.s32.totalorder %s154, %s156
      %p160 = scmp.eq.s32.totalorder %s15, 0
      %p161 = por %p159, %p160
      %p162 = scmp.ne.s32.totalorder %s154, %s156
      %p163 = scmp.eq.s32.totalorder %s20, 1
      %p164 = por %p162, %p163
      %p165 = scmp.ne.s32.totalorder %s156, %s157
      %p166 = scmp.eq.s32.totalorder %s20, 0
      %p167 = por %p165, %p166
      %p168 = scmp.ne.s32.totalorder %s156, %s157
      %p169 = scmp.eq.s32.totalorder %s21, 1
      %p170 = por %p168, %p169
      %p172 = scmp.ne.s32.totalorder %s157, %s171
      %p173 = scmp.eq.s32.totalorder %s21, 0
      %p174 = por %p172, %p173
      %s175 = ssub.s32 %s15, %s22
      %p176 = scmp.eq.s32.totalorder %s175, 0
      %s178 = sadd.s32 %s177, 1
      %s179 = scalar_select %p176, %s177, %s178
      %p182 = pneg %p176
      %p183 = scmp.eq.s32.totalorder %s15, 1
      %p184 = por %p182, %p183
      %p185 = scmp.ne.s32.totalorder %s177, %s180
      %p186 = scmp.eq.s32.totalorder %s15, 0
      %p187 = por %p185, %p186
      %p188 = scmp.ne.s32.totalorder %s177, %s180
      %p189 = scmp.eq.s32.totalorder %s20, 1
      %p190 = por %p188, %p189
      %p191 = scmp.ne.s32.totalorder %s180, %s181
      %p192 = scmp.eq.s32.totalorder %s20, 0
      %p193 = por %p191, %p192
      %p194 = scmp.ne.s32.totalorder %s180, %s181
      %p195 = scmp.eq.s32.totalorder %s21, 1
      %p196 = por %p194, %p195
      %p198 = scmp.ne.s32.totalorder %s181, %s197
      %p199 = scmp.eq.s32.totalorder %s21, 0
      %p200 = por %p198, %p199
      %p201 = scmp.le.s32.totalorder 1, %s15
      %p202 = scmp.lt.s32.totalorder %s15, 3
      %p203 = pnand %p201, %p202
      %p204 = pneg %p203
      // Predicated region
      $region9: #{tpu_custom_call.1} parent=5 // pred_check
        _
      $region10: #{tpu_custom_call.1} parent=5 // pred_check_branch
        %206 = sbr.rel (%p203) target = $region12
      $region11: #{tpu_custom_call.1} parent=5 // pred_region
        %s207 = ssub.s32 %s15, 1
        // Predicated region
        $region13: #{tpu_custom_call.1} parent=11 // pred_check
          %p208 = pneg %p62
        $region14: #{tpu_custom_call.1} parent=11 // pred_check_branch
          %210 = sbr.rel (%p208) target = $region16
        $region15: #{tpu_custom_call.1} parent=11 // pred_region
          _
        $region16: #{tpu_custom_call.1} parent=11 // pred_fallthru
          _
        // Predicated region
        $region17: #{tpu_custom_call.1} parent=11 // pred_check
          %p211 = pneg %p83
        $region18: #{tpu_custom_call.1} parent=11 // pred_check_branch
          %213 = sbr.rel (%p211) target = $region20
        $region19: #{tpu_custom_call.1} parent=11 // pred_region
          _
        $region20: #{tpu_custom_call.1} parent=11 // pred_fallthru
          _
        // Predicated region
        $region21: #{tpu_custom_call.1} parent=11 // pred_check
          %p214 = pneg %p104
        $region22: #{tpu_custom_call.1} parent=11 // pred_check_branch
          %216 = sbr.rel (%p214) target = $region24
        $region23: #{tpu_custom_call.1} parent=11 // pred_region
          _
        $region24: #{tpu_custom_call.1} parent=11 // pred_fallthru
          _
        // Predicated region
        $region25: #{tpu_custom_call.1} parent=11 // pred_check
          %p217 = pneg %p125
        $region26: #{tpu_custom_call.1} parent=11 // pred_check_branch
          %219 = sbr.rel (%p217) target = $region28
        $region27: #{tpu_custom_call.1} parent=11 // pred_region
          _
        $region28: #{tpu_custom_call.1} parent=11 // pred_fallthru
          _
        // Predicated region
        $region29: #{tpu_custom_call.1} parent=11 // pred_check
          %p220 = pneg %p146
        $region30: #{tpu_custom_call.1} parent=11 // pred_check_branch
          %222 = sbr.rel (%p220) target = $region32
        $region31: #{tpu_custom_call.1} parent=11 // pred_region
          _
        $region32: #{tpu_custom_call.1} parent=11 // pred_fallthru
          _
        // Predicated region
        $region33: #{tpu_custom_call.1} parent=11 // pred_check
          %p223 = pneg %p167
        $region34: #{tpu_custom_call.1} parent=11 // pred_check_branch
          %225 = sbr.rel (%p223) target = $region36
        $region35: #{tpu_custom_call.1} parent=11 // pred_region
          _
        $region36: #{tpu_custom_call.1} parent=11 // pred_fallthru
          _
      $region12: #{tpu_custom_call.1} parent=5 // pred_fallthru
        _
      %p226 = scmp.lt.s32.totalorder %s15, 2
      // Predicated region
      $region37: #{tpu_custom_call.1} parent=5 // pred_check
        %p227 = pneg %p226
      $region38: #{tpu_custom_call.1} parent=5 // pred_check_branch
        %229 = sbr.rel (%p227) target = $region40
      $region39: #{tpu_custom_call.1} parent=5 // pred_region
        // Predicated region
        $region41: #{tpu_custom_call.1} parent=39 // pred_check
          %p230 = pneg %p35
        $region42: #{tpu_custom_call.1} parent=39 // pred_check_branch
          %232 = sbr.rel (%p230) target = $region44
        $region43: #{tpu_custom_call.1} parent=39 // pred_region
          %s233 = smul.u32 32, %s15
          %s234 = ssub.s32 38, %s233
          %p235 = scmp.lt.s32.totalorder %s234, 32
          %s236 = scalar_select %p235, %s234, 32
          %s237 = smul.u32 128, %s236
          %p238 = scmp.lt.s32.totalorder %s233, 37
          %s239 = scalar_select %p238, %s233, 37
          %s240 = smul.addr %s239, 8
          %s241 = scalar_lea.vmem %s0, %s240
          %s242 = smul.u32 32, %s15
          %s243 = ssub.s32 38, %s242
          %p244 = scmp.lt.s32.totalorder %s243, 32
          %s245 = scalar_select %p244, %s243, 32
          %s246 = smul.u32 128, %s245
        $region44: #{tpu_custom_call.1} parent=39 // pred_fallthru
          _
      $region40: #{tpu_custom_call.1} parent=5 // pred_fallthru
        _
      %p247 = scmp.le.s32.totalorder 1, %s15
      %p248 = scmp.lt.s32.totalorder %s15, 3
      %p249 = pnand %p247, %p248
      %p250 = pneg %p249
      // Predicated region
      $region45: #{tpu_custom_call.1} parent=5 // pred_check
        _
      $region46: #{tpu_custom_call.1} parent=5 // pred_check_branch
        %252 = sbr.rel (%p249) target = $region48
      $region47: #{tpu_custom_call.1} parent=5 // pred_region
        %s253 = ssub.s32 %s15, 1
        %s254 = smul.u32 32, %s20
        %s255 = ssub.s32 38, %s254
        %p256 = scmp.lt.s32.totalorder %s255, 32
        %s257 = scalar_select %p256, %s255, 32
        %s258 = smul.u32 128, %s257
        %p259 = scmp.lt.s32.totalorder %s254, 37
        %s260 = scalar_select %p259, %s254, 37
        %s261 = smul.addr %s260, 8
        %s262 = scalar_lea.vmem %s0, %s261
        %p263 = pneg %p41
        %p264 = pneg %p38
        %p265 = pneg %p62
        %p266 = pneg %p59
        %p267 = pneg %p83
        %p268 = pneg %p80
        %p269 = pneg %p104
        %p270 = pneg %p101
        %p271 = pneg %p125
        %p272 = pneg %p122
        %p273 = pneg %p146
        %p274 = pneg %p143
        %p275 = pneg %p167
        %p276 = pneg %p164
        %p277 = pneg %p193
        %p278 = pneg %p190
        %s279 = sand.u32 %s180, 1
        %s280 = sand.u32 %s180, 1
        %s281 = smul.addr %s280, 256
        %s282 = scalar_lea.vmem [#allocation3], %s281
        %s283 = smul.u32 32, %s20
        %s284 = ssub.s32 38, %s283
        %p285 = scmp.lt.s32.totalorder %s284, 32
        %s286 = scalar_select %p285, %s284, 32
        %s287 = smul.u32 128, %s286
        %p288 = scmp.lt.s32.totalorder %s283, 37
        %s289 = scalar_select %p288, %s283, 37
        %s290 = smul.addr %s289, 8
        %s291 = scalar_lea.vmem %s0, %s290
        %s292 = smul.u32 32, %s20
        %s293 = ssub.s32 38, %s292
        %p294 = scmp.lt.s32.totalorder %s293, 32
        %s295 = scalar_select %p294, %s293, 32
        %s296 = smul.u32 128, %s295
        %s297 = smul.u32 32, %s20
        %s298 = ssub.s32 38, %s297
        %p299 = scmp.lt.s32.totalorder %s298, 32
        %s300 = scalar_select %p299, %s298, 32
        %s301 = smul.u32 128, %s300
        %v302 = vld [vmem:[%s291] sm:$0xff]
        %v303 = vld [vmem:[%s291 + $0x8] sm:$0xff]
        %v304 = vld [vmem:[%s291 + $0x10] sm:$0xff]
        %v305 = vld [vmem:[%s291 + $0x18] sm:$0xff]
        %v306 = vld [vmem:[%s291 + $0x20] sm:$0xff]
        %v307 = vld [vmem:[%s291 + $0x28] sm:$0xff]
        %v308 = vld [vmem:[%s291 + $0x30] sm:$0xff]
        %v309 = vld [vmem:[%s291 + $0x38] sm:$0xff]
        %v310 = vld [vmem:[%s291 + $0x40] sm:$0xff]
        %v311 = vld [vmem:[%s291 + $0x48] sm:$0xff]
        %v312 = vld [vmem:[%s291 + $0x50] sm:$0xff]
        %v313 = vld [vmem:[%s291 + $0x58] sm:$0xff]
        %v314 = vld [vmem:[%s291 + $0x60] sm:$0xff]
        %v315 = vld [vmem:[%s291 + $0x68] sm:$0xff]
        %v316 = vld [vmem:[%s291 + $0x70] sm:$0xff]
        %v317 = vld [vmem:[%s291 + $0x78] sm:$0xff]
        %v318 = vld [vmem:[%s291 + $0x80] sm:$0xff]
        %v319 = vld [vmem:[%s291 + $0x88] sm:$0xff]
        %v320 = vld [vmem:[%s291 + $0x90] sm:$0xff]
        %v321 = vld [vmem:[%s291 + $0x98] sm:$0xff]
        %v322 = vld [vmem:[%s291 + $0xa0] sm:$0xff]
        %v323 = vld [vmem:[%s291 + $0xa8] sm:$0xff]
        %v324 = vld [vmem:[%s291 + $0xb0] sm:$0xff]
        %v325 = vld [vmem:[%s291 + $0xb8] sm:$0xff]
        %v326 = vld [vmem:[%s291 + $0xc0] sm:$0xff]
        %v327 = vld [vmem:[%s291 + $0xc8] sm:$0xff]
        %v328 = vld [vmem:[%s291 + $0xd0] sm:$0xff]
        %v329 = vld [vmem:[%s291 + $0xd8] sm:$0xff]
        %v330 = vld [vmem:[%s291 + $0xe0] sm:$0xff]
        %v331 = vld [vmem:[%s291 + $0xe8] sm:$0xff]
        %v332 = vld [vmem:[%s291 + $0xf0] sm:$0xff]
        %v333 = vld [vmem:[%s291 + $0xf8] sm:$0xff]
        %v334 = vld [vmem:[%s1] sm:$0x7f]
        %v335 = vld [vmem:[%s2] sm:$0x1]
        %v337 = vlaneseq
        %v338 = vshrl.u32 %v337, 7
        %v339 = vsub.s32 0, %v338
        %v340 = vrot.slane %v335, %v339
        %vm342 = vcmask 56320
        %v344 = vsel %vm342, %v302, 0
        %v347 = vsel %vm342, %v303, 0
        %v350 = vsel %vm342, %v304, 0
        %v353 = vsel %vm342, %v305, 0
        %v356 = vsel %vm342, %v306, 0
        %v359 = vsel %vm342, %v307, 0
        %v362 = vsel %vm342, %v308, 0
        %v365 = vsel %vm342, %v309, 0
        %v368 = vsel %vm342, %v310, 0
        %v371 = vsel %vm342, %v311, 0
        %v374 = vsel %vm342, %v312, 0
        %v377 = vsel %vm342, %v313, 0
        %v380 = vsel %vm342, %v314, 0
        %v383 = vsel %vm342, %v315, 0
        %v386 = vsel %vm342, %v316, 0
        %v389 = vsel %vm342, %v317, 0
        %v392 = vsel %vm342, %v318, 0
        %v395 = vsel %vm342, %v319, 0
        %v398 = vsel %vm342, %v320, 0
        %v401 = vsel %vm342, %v321, 0
        %v404 = vsel %vm342, %v322, 0
        %v407 = vsel %vm342, %v323, 0
        %v410 = vsel %vm342, %v324, 0
        %v413 = vsel %vm342, %v325, 0
        %v416 = vsel %vm342, %v326, 0
        %v419 = vsel %vm342, %v327, 0
        %v422 = vsel %vm342, %v328, 0
        %v425 = vsel %vm342, %v329, 0
        %v428 = vsel %vm342, %v330, 0
        %v431 = vsel %vm342, %v331, 0
        %v434 = vsel %vm342, %v332, 0
        %v437 = vsel %vm342, %v333, 0
        %vm439 = vcmask 1046528
        %v441 = vsel %vm439, %v334, 0
        %443 = vmatprep.subr.mxu0 0.0
        %444 = vmatpush1.msra.mxu0 %v441
        %445 = vmatprep.subr.mxu0 0.0
        %446 = vmatpush1.msra.mxu0 0.0
        %447 = vmatprep.subr.mxu0 0.0
        %448 = vmatpush1.msra.mxu0 0.0
        %449 = vmatprep.subr.mxu0 0.0
        %450 = vmatpush1.msra.mxu0 0.0
        %451 = vmatprep.subr.mxu0 0.0
        %452 = vmatpush1.msra.mxu0 0.0
        %453 = vmatprep.subr.mxu0 0.0
        %454 = vmatpush1.msra.mxu0 0.0
        %455 = vmatprep.subr.mxu0 0.0
        %456 = vmatpush1.msra.mxu0 0.0
        %457 = vmatprep.subr.mxu0 0.0
        %458 = vmatpush1.msra.mxu0 0.0
        %459 = vmatprep.subr.mxu0 0.0
        %460 = vmatpush1.msra.mxu0 0.0
        %461 = vmatprep.subr.mxu0 0.0
        %462 = vmatpush1.msra.mxu0 0.0
        %463 = vmatprep.subr.mxu0 0.0
        %464 = vmatpush1.msra.mxu0 0.0
        %465 = vmatprep.subr.mxu0 0.0
        %466 = vmatpush1.msra.mxu0 0.0
        %467 = vmatprep.subr.mxu0 0.0
        %468 = vmatpush1.msra.mxu0 0.0
        %469 = vmatprep.subr.mxu0 0.0
        %470 = vmatpush1.msra.mxu0 0.0
        %471 = vmatprep.subr.mxu0 0.0
        %472 = vmatpush1.msra.mxu0 0.0
        %473 = vmatprep.subr.mxu0 0.0
        %474 = vmatpush1.msra.mxu0 0.0
        %475 = vmatprep.subr.mxu0 0.0
        %476 = vmatpush1.msra.mxu0 0.0
        %477 = vmatprep.subr.mxu0 0.0
        %478 = vmatpush1.msra.mxu0 0.0
        %479 = vmatprep.subr.mxu0 0.0
        %480 = vmatpush1.msra.mxu0 0.0
        %481 = vmatprep.subr.mxu0 0.0
        %482 = vmatpush1.msra.mxu0 0.0
        %483 = vmatprep.subr.mxu0 0.0
        %484 = vmatpush1.msra.mxu0 0.0
        %485 = vmatprep.subr.mxu0 0.0
        %486 = vmatpush1.msra.mxu0 0.0
        %487 = vmatprep.subr.mxu0 0.0
        %488 = vmatpush1.msra.mxu0 0.0
        %489 = vmatprep.subr.mxu0 0.0
        %490 = vmatpush1.msra.mxu0 0.0
        %491 = vmatprep.subr.mxu0 0.0
        %492 = vmatpush1.msra.mxu0 0.0
        %493 = vmatprep.subr.mxu0 0.0
        %494 = vmatpush1.msra.mxu0 0.0
        %495 = vmatprep.subr.mxu0 0.0
        %496 = vmatpush1.msra.mxu0 0.0
        %497 = vmatprep.subr.mxu0 0.0
        %498 = vmatpush1.msra.mxu0 0.0
        %499 = vmatprep.subr.mxu0 0.0
        %500 = vmatpush1.msra.mxu0 0.0
        %501 = vmatprep.subr.mxu0 0.0
        %502 = vmatpush1.msra.mxu0 0.0
        %503 = vmatprep.subr.mxu0 0.0
        %504 = vmatpush1.msra.mxu0 0.0
        %505 = vmatprep.subr.mxu0 0.0
        %506 = vmatpush1.msra.mxu0 0.0
        %507 = vmatprep.mubr.f32.mxu0 0.0
        %508 = vmatmul.mubr.f32.gmra.mrb[0].mxu0 %v344
        %v509 = vpop.f32.mrb[0].mxu0
        %v510 = vadd.f32 %v340, %v509
        %v511 = vpop.f32.mrb[0].mxu0
        %512 = vmatprep.mubr.f32.mxu0 0.0
        %513 = vmatmul.mubr.f32.gmra.mrb[0].mxu0 %v347
        %v514 = vpop.f32.mrb[0].mxu0
        %v515 = vadd.f32 %v340, %v514
        %v516 = vpop.f32.mrb[0].mxu0
        %517 = vmatprep.mubr.f32.mxu0 0.0
        %518 = vmatmul.mubr.f32.gmra.mrb[0].mxu0 %v350
        %v519 = vpop.f32.mrb[0].mxu0
        %v520 = vadd.f32 %v340, %v519
        %v521 = vpop.f32.mrb[0].mxu0
        %522 = vmatprep.mubr.f32.mxu0 0.0
        %523 = vmatmul.mubr.f32.gmra.mrb[0].mxu0 %v353
        %v524 = vpop.f32.mrb[0].mxu0
        %v525 = vadd.f32 %v340, %v524
        %v526 = vpop.f32.mrb[0].mxu0
        %527 = vmatprep.mubr.f32.mxu0 0.0
        %528 = vmatmul.mubr.f32.gmra.mrb[0].mxu0 %v356
        %v529 = vpop.f32.mrb[0].mxu0
        %v530 = vadd.f32 %v340, %v529
        %v531 = vpop.f32.mrb[0].mxu0
        %532 = vmatprep.mubr.f32.mxu0 0.0
        %533 = vmatmul.mubr.f32.gmra.mrb[0].mxu0 %v359
        %v534 = vpop.f32.mrb[0].mxu0
        %v535 = vadd.f32 %v340, %v534
        %v536 = vpop.f32.mrb[0].mxu0
        %537 = vmatprep.mubr.f32.mxu0 0.0
        %538 = vmatmul.mubr.f32.gmra.mrb[0].mxu0 %v362
        %v539 = vpop.f32.mrb[0].mxu0
        %v540 = vadd.f32 %v340, %v539
        %v541 = vpop.f32.mrb[0].mxu0
        %542 = vmatprep.mubr.f32.mxu0 0.0
        %543 = vmatmul.mubr.f32.gmra.mrb[0].mxu0 %v365
        %v544 = vpop.f32.mrb[0].mxu0
        %v545 = vadd.f32 %v340, %v544
        %v546 = vpop.f32.mrb[0].mxu0
        %547 = vmatprep.mubr.f32.mxu0 0.0
        %548 = vmatmul.mubr.f32.gmra.mrb[0].mxu0 %v368
        %v549 = vpop.f32.mrb[0].mxu0
        %v550 = vadd.f32 %v340, %v549
        %v551 = vpop.f32.mrb[0].mxu0
        %552 = vmatprep.mubr.f32.mxu0 0.0
        %553 = vmatmul.mubr.f32.gmra.mrb[0].mxu0 %v371
        %v554 = vpop.f32.mrb[0].mxu0
        %v555 = vadd.f32 %v340, %v554
        %v556 = vpop.f32.mrb[0].mxu0
        %557 = vmatprep.mubr.f32.mxu0 0.0
        %558 = vmatmul.mubr.f32.gmra.mrb[0].mxu0 %v374
        %v559 = vpop.f32.mrb[0].mxu0
        %v560 = vadd.f32 %v340, %v559
        %v561 = vpop.f32.mrb[0].mxu0
        %562 = vmatprep.mubr.f32.mxu0 0.0
        %563 = vmatmul.mubr.f32.gmra.mrb[0].mxu0 %v377
        %v564 = vpop.f32.mrb[0].mxu0
        %v565 = vadd.f32 %v340, %v564
        %v566 = vpop.f32.mrb[0].mxu0
        %567 = vmatprep.mubr.f32.mxu0 0.0
        %568 = vmatmul.mubr.f32.gmra.mrb[0].mxu0 %v380
        %v569 = vpop.f32.mrb[0].mxu0
        %v570 = vadd.f32 %v340, %v569
        %v571 = vpop.f32.mrb[0].mxu0
        %572 = vmatprep.mubr.f32.mxu0 0.0
        %573 = vmatmul.mubr.f32.gmra.mrb[0].mxu0 %v383
        %v574 = vpop.f32.mrb[0].mxu0
        %v575 = vadd.f32 %v340, %v574
        %v576 = vpop.f32.mrb[0].mxu0
        %577 = vmatprep.mubr.f32.mxu0 0.0
        %578 = vmatmul.mubr.f32.gmra.mrb[0].mxu0 %v386
        %v579 = vpop.f32.mrb[0].mxu0
        %v580 = vadd.f32 %v340, %v579
        %v581 = vpop.f32.mrb[0].mxu0
        %582 = vmatprep.mubr.f32.mxu0 0.0
        %583 = vmatmul.mubr.f32.gmra.mrb[0].mxu0 %v389
        %v584 = vpop.f32.mrb[0].mxu0
        %v585 = vadd.f32 %v340, %v584
        %v586 = vpop.f32.mrb[0].mxu0
        %587 = vmatprep.mubr.f32.mxu0 0.0
        %588 = vmatmul.mubr.f32.gmra.mrb[0].mxu0 %v392
        %v589 = vpop.f32.mrb[0].mxu0
        %v590 = vadd.f32 %v340, %v589
        %v591 = vpop.f32.mrb[0].mxu0
        %592 = vmatprep.mubr.f32.mxu0 0.0
        %593 = vmatmul.mubr.f32.gmra.mrb[0].mxu0 %v395
        %v594 = vpop.f32.mrb[0].mxu0
        %v595 = vadd.f32 %v340, %v594
        %v596 = vpop.f32.mrb[0].mxu0
        %597 = vmatprep.mubr.f32.mxu0 0.0
        %598 = vmatmul.mubr.f32.gmra.mrb[0].mxu0 %v398
        %v599 = vpop.f32.mrb[0].mxu0
        %v600 = vadd.f32 %v340, %v599
        %v601 = vpop.f32.mrb[0].mxu0
        %602 = vmatprep.mubr.f32.mxu0 0.0
        %603 = vmatmul.mubr.f32.gmra.mrb[0].mxu0 %v401
        %v604 = vpop.f32.mrb[0].mxu0
        %v605 = vadd.f32 %v340, %v604
        %v606 = vpop.f32.mrb[0].mxu0
        %607 = vmatprep.mubr.f32.mxu0 0.0
        %608 = vmatmul.mubr.f32.gmra.mrb[0].mxu0 %v404
        %v609 = vpop.f32.mrb[0].mxu0
        %v610 = vadd.f32 %v340, %v609
        %v611 = vpop.f32.mrb[0].mxu0
        %612 = vmatprep.mubr.f32.mxu0 0.0
        %613 = vmatmul.mubr.f32.gmra.mrb[0].mxu0 %v407
        %v614 = vpop.f32.mrb[0].mxu0
        %v615 = vadd.f32 %v340, %v614
        %v616 = vpop.f32.mrb[0].mxu0
        %617 = vmatprep.mubr.f32.mxu0 0.0
        %618 = vmatmul.mubr.f32.gmra.mrb[0].mxu0 %v410
        %v619 = vpop.f32.mrb[0].mxu0
        %v620 = vadd.f32 %v340, %v619
        %v621 = vpop.f32.mrb[0].mxu0
        %622 = vmatprep.mubr.f32.mxu0 0.0
        %623 = vmatmul.mubr.f32.gmra.mrb[0].mxu0 %v413
        %v624 = vpop.f32.mrb[0].mxu0
        %v625 = vadd.f32 %v340, %v624
        %v626 = vpop.f32.mrb[0].mxu0
        %627 = vmatprep.mubr.f32.mxu0 0.0
        %628 = vmatmul.mubr.f32.gmra.mrb[0].mxu0 %v416
        %v629 = vpop.f32.mrb[0].mxu0
        %v630 = vadd.f32 %v340, %v629
        %v631 = vpop.f32.mrb[0].mxu0
        %632 = vmatprep.mubr.f32.mxu0 0.0
        %633 = vmatmul.mubr.f32.gmra.mrb[0].mxu0 %v419
        %v634 = vpop.f32.mrb[0].mxu0
        %v635 = vadd.f32 %v340, %v634
        %v636 = vpop.f32.mrb[0].mxu0
        %637 = vmatprep.mubr.f32.mxu0 0.0
        %638 = vmatmul.mubr.f32.gmra.mrb[0].mxu0 %v422
        %v639 = vpop.f32.mrb[0].mxu0
        %v640 = vadd.f32 %v340, %v639
        %v641 = vpop.f32.mrb[0].mxu0
        %642 = vmatprep.mubr.f32.mxu0 0.0
        %643 = vmatmul.mubr.f32.gmra.mrb[0].mxu0 %v425
        %v644 = vpop.f32.mrb[0].mxu0
        %v645 = vadd.f32 %v340, %v644
        %v646 = vpop.f32.mrb[0].mxu0
        %647 = vmatprep.mubr.f32.mxu0 0.0
        %648 = vmatmul.mubr.f32.gmra.mrb[0].mxu0 %v428
        %v649 = vpop.f32.mrb[0].mxu0
        %v650 = vadd.f32 %v340, %v649
        %v651 = vpop.f32.mrb[0].mxu0
        %652 = vmatprep.mubr.f32.mxu0 0.0
        %653 = vmatmul.mubr.f32.gmra.mrb[0].mxu0 %v431
        %v654 = vpop.f32.mrb[0].mxu0
        %v655 = vadd.f32 %v340, %v654
        %v656 = vpop.f32.mrb[0].mxu0
        %657 = vmatprep.mubr.f32.mxu0 0.0
        %658 = vmatmul.mubr.f32.gmra.mrb[0].mxu0 %v434
        %v659 = vpop.f32.mrb[0].mxu0
        %v660 = vadd.f32 %v340, %v659
        %v661 = vpop.f32.mrb[0].mxu0
        %662 = vmatprep.mubr.f32.mxu0 0.0
        %663 = vmatmul.mubr.f32.gmra.mrb[0].mxu0 %v437
        %v664 = vpop.f32.mrb[0].mxu0
        %v665 = vadd.f32 %v340, %v664
        %v666 = vpop.f32.mrb[0].mxu0
        %667 = vdwg.mxu0
        %v668 = vmax.f32 %v510, 0.0
        %v669 = vmax.f32 %v515, 0.0
        %v670 = vmax.f32 %v520, 0.0
        %v671 = vmax.f32 %v525, 0.0
        %v672 = vmax.f32 %v530, 0.0
        %v673 = vmax.f32 %v535, 0.0
        %v674 = vmax.f32 %v540, 0.0
        %v675 = vmax.f32 %v545, 0.0
        %v676 = vmax.f32 %v550, 0.0
        %v677 = vmax.f32 %v555, 0.0
        %v678 = vmax.f32 %v560, 0.0
        %v679 = vmax.f32 %v565, 0.0
        %v680 = vmax.f32 %v570, 0.0
        %v681 = vmax.f32 %v575, 0.0
        %v682 = vmax.f32 %v580, 0.0
        %v683 = vmax.f32 %v585, 0.0
        %v684 = vmax.f32 %v590, 0.0
        %v685 = vmax.f32 %v595, 0.0
        %v686 = vmax.f32 %v600, 0.0
        %v687 = vmax.f32 %v605, 0.0
        %v688 = vmax.f32 %v610, 0.0
        %v689 = vmax.f32 %v615, 0.0
        %v690 = vmax.f32 %v620, 0.0
        %v691 = vmax.f32 %v625, 0.0
        %v692 = vmax.f32 %v630, 0.0
        %v693 = vmax.f32 %v635, 0.0
        %v694 = vmax.f32 %v640, 0.0
        %v695 = vmax.f32 %v645, 0.0
        %v696 = vmax.f32 %v650, 0.0
        %v697 = vmax.f32 %v655, 0.0
        %v698 = vmax.f32 %v660, 0.0
        %v699 = vmax.f32 %v665, 0.0
        %v700 = vld [vmem:[%s3] sm:$0xff]
        %v701 = vld [vmem:[%s3 + $0x8] sm:$0xff]
        %v702 = vld [vmem:[%s3 + $0x10] sm:$0xff]
        %v703 = vld [vmem:[%s3 + $0x18] sm:$0xff]
        %v704 = vld [vmem:[%s3 + $0x20] sm:$0xff]
        %v705 = vld [vmem:[%s3 + $0x28] sm:$0xff]
        %v706 = vld [vmem:[%s3 + $0x30] sm:$0xff]
        %v707 = vld [vmem:[%s3 + $0x38] sm:$0xff]
        %v708 = vld [vmem:[%s4] sm:$0x1]
        %v710 = vlaneseq
        %v711 = vshrl.u32 %v710, 7
        %v712 = vsub.s32 0, %v711
        %v713 = vrot.slane %v708, %v712
        %vm715 = vcmask 523264
        %v717 = vsel %vm715, %v668, 0
        %v720 = vsel %vm715, %v669, 0
        %v723 = vsel %vm715, %v670, 0
        %v726 = vsel %vm715, %v671, 0
        %v729 = vsel %vm715, %v672, 0
        %v732 = vsel %vm715, %v673, 0
        %v735 = vsel %vm715, %v674, 0
        %v738 = vsel %vm715, %v675, 0
        %v741 = vsel %vm715, %v676, 0
        %v744 = vsel %vm715, %v677, 0
        %v747 = vsel %vm715, %v678, 0
        %v750 = vsel %vm715, %v679, 0
        %v753 = vsel %vm715, %v680, 0
        %v756 = vsel %vm715, %v681, 0
        %v759 = vsel %vm715, %v682, 0
        %v762 = vsel %vm715, %v683, 0
        %v765 = vsel %vm715, %v684, 0
        %v768 = vsel %vm715, %v685, 0
        %v771 = vsel %vm715, %v686, 0
        %v774 = vsel %vm715, %v687, 0
        %v777 = vsel %vm715, %v688, 0
        %v780 = vsel %vm715, %v689, 0
        %v783 = vsel %vm715, %v690, 0
        %v786 = vsel %vm715, %v691, 0
        %v789 = vsel %vm715, %v692, 0
        %v792 = vsel %vm715, %v693, 0
        %v795 = vsel %vm715, %v694, 0
        %v798 = vsel %vm715, %v695, 0
        %v801 = vsel %vm715, %v696, 0
        %v804 = vsel %vm715, %v697, 0
        %v807 = vsel %vm715, %v698, 0
        %v810 = vsel %vm715, %v699, 0
        %812 = vmatprep.subr.mxu0 0.0
        %813 = vmatpush1.msra.mxu0 %v700
        %814 = vmatprep.subr.mxu0 0.0
        %815 = vmatpush1.msra.mxu0 %v701
        %816 = vmatprep.subr.mxu0 0.0
        %817 = vmatpush1.msra.mxu0 %v702
        %818 = vmatprep.subr.mxu0 0.0
        %819 = vmatpush1.msra.mxu0 %v703
        %820 = vmatprep.subr.mxu0 0.0
        %821 = vmatpush1.msra.mxu0 %v704
        %822 = vmatprep.subr.mxu0 0.0
        %823 = vmatpush1.msra.mxu0 %v705
        %824 = vmatprep.subr.mxu0 0.0
        %825 = vmatpush1.msra.mxu0 %v706
        %826 = vmatprep.subr.mxu0 0.0
        %827 = vmatpush1.msra.mxu0 %v707
        %828 = vmatprep.subr.mxu0 0.0
        %829 = vmatpush1.msra.mxu0 0.0
        %830 = vmatprep.subr.mxu0 0.0
        %831 = vmatpush1.msra.mxu0 0.0
        %832 = vmatprep.subr.mxu0 0.0
        %833 = vmatpush1.msra.mxu0 0.0
        %834 = vmatprep.subr.mxu0 0.0
        %835 = vmatpush1.msra.mxu0 0.0
        %836 = vmatprep.subr.mxu0 0.0
        %837 = vmatpush1.msra.mxu0 0.0
        %838 = vmatprep.subr.mxu0 0.0
        %839 = vmatpush1.msra.mxu0 0.0
        %840 = vmatprep.subr.mxu0 0.0
        %841 = vmatpush1.msra.mxu0 0.0
        %842 = vmatprep.subr.mxu0 0.0
        %843 = vmatpush1.msra.mxu0 0.0
        %844 = vmatprep.subr.mxu0 0.0
        %845 = vmatpush1.msra.mxu0 0.0
        %846 = vmatprep.subr.mxu0 0.0
        %847 = vmatpush1.msra.mxu0 0.0
        %848 = vmatprep.subr.mxu0 0.0
        %849 = vmatpush1.msra.mxu0 0.0
        %850 = vmatprep.subr.mxu0 0.0
        %851 = vmatpush1.msra.mxu0 0.0
        %852 = vmatprep.subr.mxu0 0.0
        %853 = vmatpush1.msra.mxu0 0.0
        %854 = vmatprep.subr.mxu0 0.0
        %855 = vmatpush1.msra.mxu0 0.0
        %856 = vmatprep.subr.mxu0 0.0
        %857 = vmatpush1.msra.mxu0 0.0
        %858 = vmatprep.subr.mxu0 0.0
        %859 = vmatpush1.msra.mxu0 0.0
        %860 = vmatprep.subr.mxu0 0.0
        %861 = vmatpush1.msra.mxu0 0.0
        %862 = vmatprep.subr.mxu0 0.0
        %863 = vmatpush1.msra.mxu0 0.0
        %864 = vmatprep.subr.mxu0 0.0
        %865 = vmatpush1.msra.mxu0 0.0
        %866 = vmatprep.subr.mxu0 0.0
        %867 = vmatpush1.msra.mxu0 0.0
        %868 = vmatprep.subr.mxu0 0.0
        %869 = vmatpush1.msra.mxu0 0.0
        %870 = vmatprep.subr.mxu0 0.0
        %871 = vmatpush1.msra.mxu0 0.0
        %872 = vmatprep.subr.mxu0 0.0
        %873 = vmatpush1.msra.mxu0 0.0
        %874 = vmatprep.subr.mxu0 0.0
        %875 = vmatpush1.msra.mxu0 0.0
        %876 = vmatprep.mubr.f32.mxu0 0.0
        %877 = vmatmul.mubr.f32.gmra.mrb[0].mxu0 %v717
        %v878 = vpop.f32.mrb[0].mxu0
        %v879 = vadd.f32 %v713, %v878
        %v880 = vpop.f32.mrb[0].mxu0
        %881 = vmatprep.mubr.f32.mxu0 0.0
        %882 = vmatmul.mubr.f32.gmra.mrb[0].mxu0 %v720
        %v883 = vpop.f32.mrb[0].mxu0
        %v884 = vadd.f32 %v713, %v883
        %v885 = vpop.f32.mrb[0].mxu0
        %886 = vmatprep.mubr.f32.mxu0 0.0
        %887 = vmatmul.mubr.f32.gmra.mrb[0].mxu0 %v723
        %v888 = vpop.f32.mrb[0].mxu0
        %v889 = vadd.f32 %v713, %v888
        %v890 = vpop.f32.mrb[0].mxu0
        %891 = vmatprep.mubr.f32.mxu0 0.0
        %892 = vmatmul.mubr.f32.gmra.mrb[0].mxu0 %v726
        %v893 = vpop.f32.mrb[0].mxu0
        %v894 = vadd.f32 %v713, %v893
        %v895 = vpop.f32.mrb[0].mxu0
        %896 = vmatprep.mubr.f32.mxu0 0.0
        %897 = vmatmul.mubr.f32.gmra.mrb[0].mxu0 %v729
        %v898 = vpop.f32.mrb[0].mxu0
        %v899 = vadd.f32 %v713, %v898
        %v900 = vpop.f32.mrb[0].mxu0
        %901 = vmatprep.mubr.f32.mxu0 0.0
        %902 = vmatmul.mubr.f32.gmra.mrb[0].mxu0 %v732
        %v903 = vpop.f32.mrb[0].mxu0
        %v904 = vadd.f32 %v713, %v903
        %v905 = vpop.f32.mrb[0].mxu0
        %906 = vmatprep.mubr.f32.mxu0 0.0
        %907 = vmatmul.mubr.f32.gmra.mrb[0].mxu0 %v735
        %v908 = vpop.f32.mrb[0].mxu0
        %v909 = vadd.f32 %v713, %v908
        %v910 = vpop.f32.mrb[0].mxu0
        %911 = vmatprep.mubr.f32.mxu0 0.0
        %912 = vmatmul.mubr.f32.gmra.mrb[0].mxu0 %v738
        %v913 = vpop.f32.mrb[0].mxu0
        %v914 = vadd.f32 %v713, %v913
        %v915 = vpop.f32.mrb[0].mxu0
        %916 = vmatprep.mubr.f32.mxu0 0.0
        %917 = vmatmul.mubr.f32.gmra.mrb[0].mxu0 %v741
        %v918 = vpop.f32.mrb[0].mxu0
        %v919 = vadd.f32 %v713, %v918
        %v920 = vpop.f32.mrb[0].mxu0
        %921 = vmatprep.mubr.f32.mxu0 0.0
        %922 = vmatmul.mubr.f32.gmra.mrb[0].mxu0 %v744
        %v923 = vpop.f32.mrb[0].mxu0
        %v924 = vadd.f32 %v713, %v923
        %v925 = vpop.f32.mrb[0].mxu0
        %926 = vmatprep.mubr.f32.mxu0 0.0
        %927 = vmatmul.mubr.f32.gmra.mrb[0].mxu0 %v747
        %v928 = vpop.f32.mrb[0].mxu0
        %v929 = vadd.f32 %v713, %v928
        %v930 = vpop.f32.mrb[0].mxu0
        %931 = vmatprep.mubr.f32.mxu0 0.0
        %932 = vmatmul.mubr.f32.gmra.mrb[0].mxu0 %v750
        %v933 = vpop.f32.mrb[0].mxu0
        %v934 = vadd.f32 %v713, %v933
        %v935 = vpop.f32.mrb[0].mxu0
        %936 = vmatprep.mubr.f32.mxu0 0.0
        %937 = vmatmul.mubr.f32.gmra.mrb[0].mxu0 %v753
        %v938 = vpop.f32.mrb[0].mxu0
        %v939 = vadd.f32 %v713, %v938
        %v940 = vpop.f32.mrb[0].mxu0
        %941 = vmatprep.mubr.f32.mxu0 0.0
        %942 = vmatmul.mubr.f32.gmra.mrb[0].mxu0 %v756
        %v943 = vpop.f32.mrb[0].mxu0
        %v944 = vadd.f32 %v713, %v943
        %v945 = vpop.f32.mrb[0].mxu0
        %946 = vmatprep.mubr.f32.mxu0 0.0
        %947 = vmatmul.mubr.f32.gmra.mrb[0].mxu0 %v759
        %v948 = vpop.f32.mrb[0].mxu0
        %v949 = vadd.f32 %v713, %v948
        %v950 = vpop.f32.mrb[0].mxu0
        %951 = vmatprep.mubr.f32.mxu0 0.0
        %952 = vmatmul.mubr.f32.gmra.mrb[0].mxu0 %v762
        %v953 = vpop.f32.mrb[0].mxu0
        %v954 = vadd.f32 %v713, %v953
        %v955 = vpop.f32.mrb[0].mxu0
        %956 = vmatprep.mubr.f32.mxu0 0.0
        %957 = vmatmul.mubr.f32.gmra.mrb[0].mxu0 %v765
        %v958 = vpop.f32.mrb[0].mxu0
        %v959 = vadd.f32 %v713, %v958
        %v960 = vpop.f32.mrb[0].mxu0
        %961 = vmatprep.mubr.f32.mxu0 0.0
        %962 = vmatmul.mubr.f32.gmra.mrb[0].mxu0 %v768
        %v963 = vpop.f32.mrb[0].mxu0
        %v964 = vadd.f32 %v713, %v963
        %v965 = vpop.f32.mrb[0].mxu0
        %966 = vmatprep.mubr.f32.mxu0 0.0
        %967 = vmatmul.mubr.f32.gmra.mrb[0].mxu0 %v771
        %v968 = vpop.f32.mrb[0].mxu0
        %v969 = vadd.f32 %v713, %v968
        %v970 = vpop.f32.mrb[0].mxu0
        %971 = vmatprep.mubr.f32.mxu0 0.0
        %972 = vmatmul.mubr.f32.gmra.mrb[0].mxu0 %v774
        %v973 = vpop.f32.mrb[0].mxu0
        %v974 = vadd.f32 %v713, %v973
        %v975 = vpop.f32.mrb[0].mxu0
        %976 = vmatprep.mubr.f32.mxu0 0.0
        %977 = vmatmul.mubr.f32.gmra.mrb[0].mxu0 %v777
        %v978 = vpop.f32.mrb[0].mxu0
        %v979 = vadd.f32 %v713, %v978
        %v980 = vpop.f32.mrb[0].mxu0
        %981 = vmatprep.mubr.f32.mxu0 0.0
        %982 = vmatmul.mubr.f32.gmra.mrb[0].mxu0 %v780
        %v983 = vpop.f32.mrb[0].mxu0
        %v984 = vadd.f32 %v713, %v983
        %v985 = vpop.f32.mrb[0].mxu0
        %986 = vmatprep.mubr.f32.mxu0 0.0
        %987 = vmatmul.mubr.f32.gmra.mrb[0].mxu0 %v783
        %v988 = vpop.f32.mrb[0].mxu0
        %v989 = vadd.f32 %v713, %v988
        %v990 = vpop.f32.mrb[0].mxu0
        %991 = vmatprep.mubr.f32.mxu0 0.0
        %992 = vmatmul.mubr.f32.gmra.mrb[0].mxu0 %v786
        %v993 = vpop.f32.mrb[0].mxu0
        %v994 = vadd.f32 %v713, %v993
        %v995 = vpop.f32.mrb[0].mxu0
        %996 = vmatprep.mubr.f32.mxu0 0.0
        %997 = vmatmul.mubr.f32.gmra.mrb[0].mxu0 %v789
        %v998 = vpop.f32.mrb[0].mxu0
        %v999 = vadd.f32 %v713, %v998
        %v1000 = vpop.f32.mrb[0].mxu0
        %1001 = vmatprep.mubr.f32.mxu0 0.0
        %1002 = vmatmul.mubr.f32.gmra.mrb[0].mxu0 %v792
        %v1003 = vpop.f32.mrb[0].mxu0
        %v1004 = vadd.f32 %v713, %v1003
        %v1005 = vpop.f32.mrb[0].mxu0
        %1006 = vmatprep.mubr.f32.mxu0 0.0
        %1007 = vmatmul.mubr.f32.gmra.mrb[0].mxu0 %v795
        %v1008 = vpop.f32.mrb[0].mxu0
        %v1009 = vadd.f32 %v713, %v1008
        %v1010 = vpop.f32.mrb[0].mxu0
        %1011 = vmatprep.mubr.f32.mxu0 0.0
        %1012 = vmatmul.mubr.f32.gmra.mrb[0].mxu0 %v798
        %v1013 = vpop.f32.mrb[0].mxu0
        %v1014 = vadd.f32 %v713, %v1013
        %v1015 = vpop.f32.mrb[0].mxu0
        %1016 = vmatprep.mubr.f32.mxu0 0.0
        %1017 = vmatmul.mubr.f32.gmra.mrb[0].mxu0 %v801
        %v1018 = vpop.f32.mrb[0].mxu0
        %v1019 = vadd.f32 %v713, %v1018
        %v1020 = vpop.f32.mrb[0].mxu0
        %1021 = vmatprep.mubr.f32.mxu0 0.0
        %1022 = vmatmul.mubr.f32.gmra.mrb[0].mxu0 %v804
        %v1023 = vpop.f32.mrb[0].mxu0
        %v1024 = vadd.f32 %v713, %v1023
        %v1025 = vpop.f32.mrb[0].mxu0
        %1026 = vmatprep.mubr.f32.mxu0 0.0
        %1027 = vmatmul.mubr.f32.gmra.mrb[0].mxu0 %v807
        %v1028 = vpop.f32.mrb[0].mxu0
        %v1029 = vadd.f32 %v713, %v1028
        %v1030 = vpop.f32.mrb[0].mxu0
        %1031 = vmatprep.mubr.f32.mxu0 0.0
        %1032 = vmatmul.mubr.f32.gmra.mrb[0].mxu0 %v810
        %v1033 = vpop.f32.mrb[0].mxu0
        %v1034 = vadd.f32 %v713, %v1033
        %v1035 = vpop.f32.mrb[0].mxu0
        %1036 = vdwg.mxu0
        %v1037 = vmax.f32 %v879, 0.0
        %v1038 = vmax.f32 %v884, 0.0
        %v1039 = vmax.f32 %v889, 0.0
        %v1040 = vmax.f32 %v894, 0.0
        %v1041 = vmax.f32 %v899, 0.0
        %v1042 = vmax.f32 %v904, 0.0
        %v1043 = vmax.f32 %v909, 0.0
        %v1044 = vmax.f32 %v914, 0.0
        %v1045 = vmax.f32 %v919, 0.0
        %v1046 = vmax.f32 %v924, 0.0
        %v1047 = vmax.f32 %v929, 0.0
        %v1048 = vmax.f32 %v934, 0.0
        %v1049 = vmax.f32 %v939, 0.0
        %v1050 = vmax.f32 %v944, 0.0
        %v1051 = vmax.f32 %v949, 0.0
        %v1052 = vmax.f32 %v954, 0.0
        %v1053 = vmax.f32 %v959, 0.0
        %v1054 = vmax.f32 %v964, 0.0
        %v1055 = vmax.f32 %v969, 0.0
        %v1056 = vmax.f32 %v974, 0.0
        %v1057 = vmax.f32 %v979, 0.0
        %v1058 = vmax.f32 %v984, 0.0
        %v1059 = vmax.f32 %v989, 0.0
        %v1060 = vmax.f32 %v994, 0.0
        %v1061 = vmax.f32 %v999, 0.0
        %v1062 = vmax.f32 %v1004, 0.0
        %v1063 = vmax.f32 %v1009, 0.0
        %v1064 = vmax.f32 %v1014, 0.0
        %v1065 = vmax.f32 %v1019, 0.0
        %v1066 = vmax.f32 %v1024, 0.0
        %v1067 = vmax.f32 %v1029, 0.0
        %v1068 = vmax.f32 %v1034, 0.0
        %v1069 = vld [vmem:[%s5] sm:$0xff]
        %v1070 = vld [vmem:[%s5 + $0x8] sm:$0xff]
        %v1071 = vld [vmem:[%s5 + $0x10] sm:$0xff]
        %v1072 = vld [vmem:[%s5 + $0x18] sm:$0xff]
        %v1073 = vld [vmem:[#allocation2] sm:$0x1]
        %v1075 = vlaneseq
        %v1076 = vshrl.u32 %v1075, 7
        %v1077 = vsub.s32 0, %v1076
        %v1078 = vrot.slane %v1073, %v1077
        %vm1080 = vcmask 261120
        %v1082 = vsel %vm1080, %v1037, 0
        %v1085 = vsel %vm1080, %v1038, 0
        %v1088 = vsel %vm1080, %v1039, 0
        %v1091 = vsel %vm1080, %v1040, 0
        %v1094 = vsel %vm1080, %v1041, 0
        %v1097 = vsel %vm1080, %v1042, 0
        %v1100 = vsel %vm1080, %v1043, 0
        %v1103 = vsel %vm1080, %v1044, 0
        %v1106 = vsel %vm1080, %v1045, 0
        %v1109 = vsel %vm1080, %v1046, 0
        %v1112 = vsel %vm1080, %v1047, 0
        %v1115 = vsel %vm1080, %v1048, 0
        %v1118 = vsel %vm1080, %v1049, 0
        %v1121 = vsel %vm1080, %v1050, 0
        %v1124 = vsel %vm1080, %v1051, 0
        %v1127 = vsel %vm1080, %v1052, 0
        %v1130 = vsel %vm1080, %v1053, 0
        %v1133 = vsel %vm1080, %v1054, 0
        %v1136 = vsel %vm1080, %v1055, 0
        %v1139 = vsel %vm1080, %v1056, 0
        %v1142 = vsel %vm1080, %v1057, 0
        %v1145 = vsel %vm1080, %v1058, 0
        %v1148 = vsel %vm1080, %v1059, 0
        %v1151 = vsel %vm1080, %v1060, 0
        %v1154 = vsel %vm1080, %v1061, 0
        %v1157 = vsel %vm1080, %v1062, 0
        %v1160 = vsel %vm1080, %v1063, 0
        %v1163 = vsel %vm1080, %v1064, 0
        %v1166 = vsel %vm1080, %v1065, 0
        %v1169 = vsel %vm1080, %v1066, 0
        %v1172 = vsel %vm1080, %v1067, 0
        %v1175 = vsel %vm1080, %v1068, 0
        %1177 = vmatprep.subr.mxu0 0.0
        %1178 = vmatpush1.msra.mxu0 %v1069
        %1179 = vmatprep.subr.mxu0 0.0
        %1180 = vmatpush1.msra.mxu0 %v1070
        %1181 = vmatprep.subr.mxu0 0.0
        %1182 = vmatpush1.msra.mxu0 %v1071
        %1183 = vmatprep.subr.mxu0 0.0
        %1184 = vmatpush1.msra.mxu0 %v1072
        %1185 = vmatprep.subr.mxu0 0.0
        %1186 = vmatpush1.msra.mxu0 0.0
        %1187 = vmatprep.subr.mxu0 0.0
        %1188 = vmatpush1.msra.mxu0 0.0
        %1189 = vmatprep.subr.mxu0 0.0
        %1190 = vmatpush1.msra.mxu0 0.0
        %1191 = vmatprep.subr.mxu0 0.0
        %1192 = vmatpush1.msra.mxu0 0.0
        %1193 = vmatprep.subr.mxu0 0.0
        %1194 = vmatpush1.msra.mxu0 0.0
        %1195 = vmatprep.subr.mxu0 0.0
        %1196 = vmatpush1.msra.mxu0 0.0
        %1197 = vmatprep.subr.mxu0 0.0
        %1198 = vmatpush1.msra.mxu0 0.0
        %1199 = vmatprep.subr.mxu0 0.0
        %1200 = vmatpush1.msra.mxu0 0.0
        %1201 = vmatprep.subr.mxu0 0.0
        %1202 = vmatpush1.msra.mxu0 0.0
        %1203 = vmatprep.subr.mxu0 0.0
        %1204 = vmatpush1.msra.mxu0 0.0
        %1205 = vmatprep.subr.mxu0 0.0
        %1206 = vmatpush1.msra.mxu0 0.0
        %1207 = vmatprep.subr.mxu0 0.0
        %1208 = vmatpush1.msra.mxu0 0.0
        %1209 = vmatprep.subr.mxu0 0.0
        %1210 = vmatpush1.msra.mxu0 0.0
        %1211 = vmatprep.subr.mxu0 0.0
        %1212 = vmatpush1.msra.mxu0 0.0
        %1213 = vmatprep.subr.mxu0 0.0
        %1214 = vmatpush1.msra.mxu0 0.0
        %1215 = vmatprep.subr.mxu0 0.0
        %1216 = vmatpush1.msra.mxu0 0.0
        %1217 = vmatprep.subr.mxu0 0.0
        %1218 = vmatpush1.msra.mxu0 0.0
        %1219 = vmatprep.subr.mxu0 0.0
        %1220 = vmatpush1.msra.mxu0 0.0
        %1221 = vmatprep.subr.mxu0 0.0
        %1222 = vmatpush1.msra.mxu0 0.0
        %1223 = vmatprep.subr.mxu0 0.0
        %1224 = vmatpush1.msra.mxu0 0.0
        %1225 = vmatprep.subr.mxu0 0.0
        %1226 = vmatpush1.msra.mxu0 0.0
        %1227 = vmatprep.subr.mxu0 0.0
        %1228 = vmatpush1.msra.mxu0 0.0
        %1229 = vmatprep.subr.mxu0 0.0
        %1230 = vmatpush1.msra.mxu0 0.0
        %1231 = vmatprep.subr.mxu0 0.0
        %1232 = vmatpush1.msra.mxu0 0.0
        %1233 = vmatprep.subr.mxu0 0.0
        %1234 = vmatpush1.msra.mxu0 0.0
        %1235 = vmatprep.subr.mxu0 0.0
        %1236 = vmatpush1.msra.mxu0 0.0
        %1237 = vmatprep.subr.mxu0 0.0
        %1238 = vmatpush1.msra.mxu0 0.0
        %1239 = vmatprep.subr.mxu0 0.0
        %1240 = vmatpush1.msra.mxu0 0.0
        %1241 = vmatprep.mubr.f32.mxu0 0.0
        %1242 = vmatmul.mubr.f32.gmra.mrb[0].mxu0 %v1082
        %v1243 = vpop.f32.mrb[0].mxu0
        %v1244 = vadd.f32 %v1078, %v1243
        %v1245 = vpop.f32.mrb[0].mxu0
        %1246 = vmatprep.mubr.f32.mxu0 0.0
        %1247 = vmatmul.mubr.f32.gmra.mrb[0].mxu0 %v1085
        %v1248 = vpop.f32.mrb[0].mxu0
        %v1249 = vadd.f32 %v1078, %v1248
        %v1250 = vpop.f32.mrb[0].mxu0
        %1251 = vmatprep.mubr.f32.mxu0 0.0
        %1252 = vmatmul.mubr.f32.gmra.mrb[0].mxu0 %v1088
        %v1253 = vpop.f32.mrb[0].mxu0
        %v1254 = vadd.f32 %v1078, %v1253
        %v1255 = vpop.f32.mrb[0].mxu0
        %1256 = vmatprep.mubr.f32.mxu0 0.0
        %1257 = vmatmul.mubr.f32.gmra.mrb[0].mxu0 %v1091
        %v1258 = vpop.f32.mrb[0].mxu0
        %v1259 = vadd.f32 %v1078, %v1258
        %v1260 = vpop.f32.mrb[0].mxu0
        %1261 = vmatprep.mubr.f32.mxu0 0.0
        %1262 = vmatmul.mubr.f32.gmra.mrb[0].mxu0 %v1094
        %v1263 = vpop.f32.mrb[0].mxu0
        %v1264 = vadd.f32 %v1078, %v1263
        %v1265 = vpop.f32.mrb[0].mxu0
        %1266 = vmatprep.mubr.f32.mxu0 0.0
        %1267 = vmatmul.mubr.f32.gmra.mrb[0].mxu0 %v1097
        %v1268 = vpop.f32.mrb[0].mxu0
        %v1269 = vadd.f32 %v1078, %v1268
        %v1270 = vpop.f32.mrb[0].mxu0
        %1271 = vmatprep.mubr.f32.mxu0 0.0
        %1272 = vmatmul.mubr.f32.gmra.mrb[0].mxu0 %v1100
        %v1273 = vpop.f32.mrb[0].mxu0
        %v1274 = vadd.f32 %v1078, %v1273
        %v1275 = vpop.f32.mrb[0].mxu0
        %1276 = vmatprep.mubr.f32.mxu0 0.0
        %1277 = vmatmul.mubr.f32.gmra.mrb[0].mxu0 %v1103
        %v1278 = vpop.f32.mrb[0].mxu0
        %v1279 = vadd.f32 %v1078, %v1278
        %v1280 = vpop.f32.mrb[0].mxu0
        %1281 = vmatprep.mubr.f32.mxu0 0.0
        %1282 = vmatmul.mubr.f32.gmra.mrb[0].mxu0 %v1106
        %v1283 = vpop.f32.mrb[0].mxu0
        %v1284 = vadd.f32 %v1078, %v1283
        %v1285 = vpop.f32.mrb[0].mxu0
        %1286 = vmatprep.mubr.f32.mxu0 0.0
        %1287 = vmatmul.mubr.f32.gmra.mrb[0].mxu0 %v1109
        %v1288 = vpop.f32.mrb[0].mxu0
        %v1289 = vadd.f32 %v1078, %v1288
        %v1290 = vpop.f32.mrb[0].mxu0
        %1291 = vmatprep.mubr.f32.mxu0 0.0
        %1292 = vmatmul.mubr.f32.gmra.mrb[0].mxu0 %v1112
        %v1293 = vpop.f32.mrb[0].mxu0
        %v1294 = vadd.f32 %v1078, %v1293
        %v1295 = vpop.f32.mrb[0].mxu0
        %1296 = vmatprep.mubr.f32.mxu0 0.0
        %1297 = vmatmul.mubr.f32.gmra.mrb[0].mxu0 %v1115
        %v1298 = vpop.f32.mrb[0].mxu0
        %v1299 = vadd.f32 %v1078, %v1298
        %v1300 = vpop.f32.mrb[0].mxu0
        %1301 = vmatprep.mubr.f32.mxu0 0.0
        %1302 = vmatmul.mubr.f32.gmra.mrb[0].mxu0 %v1118
        %v1303 = vpop.f32.mrb[0].mxu0
        %v1304 = vadd.f32 %v1078, %v1303
        %v1305 = vpop.f32.mrb[0].mxu0
        %1306 = vmatprep.mubr.f32.mxu0 0.0
        %1307 = vmatmul.mubr.f32.gmra.mrb[0].mxu0 %v1121
        %v1308 = vpop.f32.mrb[0].mxu0
        %v1309 = vadd.f32 %v1078, %v1308
        %v1310 = vpop.f32.mrb[0].mxu0
        %1311 = vmatprep.mubr.f32.mxu0 0.0
        %1312 = vmatmul.mubr.f32.gmra.mrb[0].mxu0 %v1124
        %v1313 = vpop.f32.mrb[0].mxu0
        %v1314 = vadd.f32 %v1078, %v1313
        %v1315 = vpop.f32.mrb[0].mxu0
        %1316 = vmatprep.mubr.f32.mxu0 0.0
        %1317 = vmatmul.mubr.f32.gmra.mrb[0].mxu0 %v1127
        %v1318 = vpop.f32.mrb[0].mxu0
        %v1319 = vadd.f32 %v1078, %v1318
        %v1320 = vpop.f32.mrb[0].mxu0
        %1321 = vmatprep.mubr.f32.mxu0 0.0
        %1322 = vmatmul.mubr.f32.gmra.mrb[0].mxu0 %v1130
        %v1323 = vpop.f32.mrb[0].mxu0
        %v1324 = vadd.f32 %v1078, %v1323
        %v1325 = vpop.f32.mrb[0].mxu0
        %1326 = vmatprep.mubr.f32.mxu0 0.0
        %1327 = vmatmul.mubr.f32.gmra.mrb[0].mxu0 %v1133
        %v1328 = vpop.f32.mrb[0].mxu0
        %v1329 = vadd.f32 %v1078, %v1328
        %v1330 = vpop.f32.mrb[0].mxu0
        %1331 = vmatprep.mubr.f32.mxu0 0.0
        %1332 = vmatmul.mubr.f32.gmra.mrb[0].mxu0 %v1136
        %v1333 = vpop.f32.mrb[0].mxu0
        %v1334 = vadd.f32 %v1078, %v1333
        %v1335 = vpop.f32.mrb[0].mxu0
        %1336 = vmatprep.mubr.f32.mxu0 0.0
        %1337 = vmatmul.mubr.f32.gmra.mrb[0].mxu0 %v1139
        %v1338 = vpop.f32.mrb[0].mxu0
        %v1339 = vadd.f32 %v1078, %v1338
        %v1340 = vpop.f32.mrb[0].mxu0
        %1341 = vmatprep.mubr.f32.mxu0 0.0
        %1342 = vmatmul.mubr.f32.gmra.mrb[0].mxu0 %v1142
        %v1343 = vpop.f32.mrb[0].mxu0
        %v1344 = vadd.f32 %v1078, %v1343
        %v1345 = vpop.f32.mrb[0].mxu0
        %1346 = vmatprep.mubr.f32.mxu0 0.0
        %1347 = vmatmul.mubr.f32.gmra.mrb[0].mxu0 %v1145
        %v1348 = vpop.f32.mrb[0].mxu0
        %v1349 = vadd.f32 %v1078, %v1348
        %v1350 = vpop.f32.mrb[0].mxu0
        %1351 = vmatprep.mubr.f32.mxu0 0.0
        %1352 = vmatmul.mubr.f32.gmra.mrb[0].mxu0 %v1148
        %v1353 = vpop.f32.mrb[0].mxu0
        %v1354 = vadd.f32 %v1078, %v1353
        %v1355 = vpop.f32.mrb[0].mxu0
        %1356 = vmatprep.mubr.f32.mxu0 0.0
        %1357 = vmatmul.mubr.f32.gmra.mrb[0].mxu0 %v1151
        %v1358 = vpop.f32.mrb[0].mxu0
        %v1359 = vadd.f32 %v1078, %v1358
        %v1360 = vpop.f32.mrb[0].mxu0
        %1361 = vmatprep.mubr.f32.mxu0 0.0
        %1362 = vmatmul.mubr.f32.gmra.mrb[0].mxu0 %v1154
        %v1363 = vpop.f32.mrb[0].mxu0
        %v1364 = vadd.f32 %v1078, %v1363
        %v1365 = vpop.f32.mrb[0].mxu0
        %1366 = vmatprep.mubr.f32.mxu0 0.0
        %1367 = vmatmul.mubr.f32.gmra.mrb[0].mxu0 %v1157
        %v1368 = vpop.f32.mrb[0].mxu0
        %v1369 = vadd.f32 %v1078, %v1368
        %v1370 = vpop.f32.mrb[0].mxu0
        %1371 = vmatprep.mubr.f32.mxu0 0.0
        %1372 = vmatmul.mubr.f32.gmra.mrb[0].mxu0 %v1160
        %v1373 = vpop.f32.mrb[0].mxu0
        %v1374 = vadd.f32 %v1078, %v1373
        %v1375 = vpop.f32.mrb[0].mxu0
        %1376 = vmatprep.mubr.f32.mxu0 0.0
        %1377 = vmatmul.mubr.f32.gmra.mrb[0].mxu0 %v1163
        %v1378 = vpop.f32.mrb[0].mxu0
        %v1379 = vadd.f32 %v1078, %v1378
        %v1380 = vpop.f32.mrb[0].mxu0
        %1381 = vmatprep.mubr.f32.mxu0 0.0
        %1382 = vmatmul.mubr.f32.gmra.mrb[0].mxu0 %v1166
        %v1383 = vpop.f32.mrb[0].mxu0
        %v1384 = vadd.f32 %v1078, %v1383
        %v1385 = vpop.f32.mrb[0].mxu0
        %1386 = vmatprep.mubr.f32.mxu0 0.0
        %1387 = vmatmul.mubr.f32.gmra.mrb[0].mxu0 %v1169
        %v1388 = vpop.f32.mrb[0].mxu0
        %v1389 = vadd.f32 %v1078, %v1388
        %v1390 = vpop.f32.mrb[0].mxu0
        %1391 = vmatprep.mubr.f32.mxu0 0.0
        %1392 = vmatmul.mubr.f32.gmra.mrb[0].mxu0 %v1172
        %v1393 = vpop.f32.mrb[0].mxu0
        %v1394 = vadd.f32 %v1078, %v1393
        %v1395 = vpop.f32.mrb[0].mxu0
        %1396 = vmatprep.mubr.f32.mxu0 0.0
        %1397 = vmatmul.mubr.f32.gmra.mrb[0].mxu0 %v1175
        %v1398 = vpop.f32.mrb[0].mxu0
        %v1399 = vadd.f32 %v1078, %v1398
        %v1400 = vpop.f32.mrb[0].mxu0
        %1401 = vdwg.mxu0
        %vm1402 = vcmask 7168
        %1403 = vst.msk [vmem:[%s282] sm:$0xff] %vm1402, %v1244
        %1404 = vst.msk [vmem:[%s282 + $0x8] sm:$0xff] %vm1402, %v1249
        %1405 = vst.msk [vmem:[%s282 + $0x10] sm:$0xff] %vm1402, %v1254
        %1406 = vst.msk [vmem:[%s282 + $0x18] sm:$0xff] %vm1402, %v1259
        %1407 = vst.msk [vmem:[%s282 + $0x20] sm:$0xff] %vm1402, %v1264
        %1408 = vst.msk [vmem:[%s282 + $0x28] sm:$0xff] %vm1402, %v1269
        %1409 = vst.msk [vmem:[%s282 + $0x30] sm:$0xff] %vm1402, %v1274
        %1410 = vst.msk [vmem:[%s282 + $0x38] sm:$0xff] %vm1402, %v1279
        %1411 = vst.msk [vmem:[%s282 + $0x40] sm:$0xff] %vm1402, %v1284
        %1412 = vst.msk [vmem:[%s282 + $0x48] sm:$0xff] %vm1402, %v1289
        %1413 = vst.msk [vmem:[%s282 + $0x50] sm:$0xff] %vm1402, %v1294
        %1414 = vst.msk [vmem:[%s282 + $0x58] sm:$0xff] %vm1402, %v1299
        %1415 = vst.msk [vmem:[%s282 + $0x60] sm:$0xff] %vm1402, %v1304
        %1416 = vst.msk [vmem:[%s282 + $0x68] sm:$0xff] %vm1402, %v1309
        %1417 = vst.msk [vmem:[%s282 + $0x70] sm:$0xff] %vm1402, %v1314
        %1418 = vst.msk [vmem:[%s282 + $0x78] sm:$0xff] %vm1402, %v1319
        %1419 = vst.msk [vmem:[%s282 + $0x80] sm:$0xff] %vm1402, %v1324
        %1420 = vst.msk [vmem:[%s282 + $0x88] sm:$0xff] %vm1402, %v1329
        %1421 = vst.msk [vmem:[%s282 + $0x90] sm:$0xff] %vm1402, %v1334
        %1422 = vst.msk [vmem:[%s282 + $0x98] sm:$0xff] %vm1402, %v1339
        %1423 = vst.msk [vmem:[%s282 + $0xa0] sm:$0xff] %vm1402, %v1344
        %1424 = vst.msk [vmem:[%s282 + $0xa8] sm:$0xff] %vm1402, %v1349
        %1425 = vst.msk [vmem:[%s282 + $0xb0] sm:$0xff] %vm1402, %v1354
        %1426 = vst.msk [vmem:[%s282 + $0xb8] sm:$0xff] %vm1402, %v1359
        %1427 = vst.msk [vmem:[%s282 + $0xc0] sm:$0xff] %vm1402, %v1364
        %1428 = vst.msk [vmem:[%s282 + $0xc8] sm:$0xff] %vm1402, %v1369
        %1429 = vst.msk [vmem:[%s282 + $0xd0] sm:$0xff] %vm1402, %v1374
        %1430 = vst.msk [vmem:[%s282 + $0xd8] sm:$0xff] %vm1402, %v1379
        %1431 = vst.msk [vmem:[%s282 + $0xe0] sm:$0xff] %vm1402, %v1384
        %1432 = vst.msk [vmem:[%s282 + $0xe8] sm:$0xff] %vm1402, %v1389
        %1433 = vst.msk [vmem:[%s282 + $0xf0] sm:$0xff] %vm1402, %v1394
        %1434 = vst.msk [vmem:[%s282 + $0xf8] sm:$0xff] %vm1402, %v1399
        %s1435 = sand.u32 %s180, 1
        %s1436 = sand.u32 %s180, 1
        %s1437 = smul.addr %s1436, 256
        %s1438 = scalar_lea.vmem [#allocation3], %s1437
        // Predicated region
        $region49: #{tpu_custom_call.1} parent=47 // pred_check
          %p1439 = pneg %p190
        $region50: #{tpu_custom_call.1} parent=47 // pred_check_branch
          %1441 = sbr.rel (%p1439) target = $region52
        $region51: #{tpu_custom_call.1} parent=47 // pred_region
          %s1442 = smul.u32 32, %s20
          %s1443 = ssub.s32 38, %s1442
          %p1444 = scmp.lt.s32.totalorder %s1443, 32
          %s1445 = scalar_select %p1444, %s1443, 32
          %s1446 = smul.u32 128, %s1445
          %p1447 = scmp.ne.s32.totalorder 0, %s1446
          %s1448 = smul.addr %s1442, 8
          %s1449 = scalar_lea.vmem %s7, %s1448
          // Predicated region
          $region53: #{tpu_custom_call.1} parent=51 // pred_check
            %p1450 = pneg %p1447
          $region54: #{tpu_custom_call.1} parent=51 // pred_check_branch
            %1452 = sbr.rel (%p1450) target = $region56
          $region55: #{tpu_custom_call.1} parent=51 // pred_region
            // Predicated region
            $region57: #{tpu_custom_call.1} parent=55 // pred_check
              _
            $region58: #{tpu_custom_call.1} parent=55 // pred_check_branch
              %1454 = sbr.rel (0) target = $region60
            $region59: #{tpu_custom_call.1} parent=55 // pred_region
              // Predicated region
              $region79: #{tpu_custom_call.1} parent=59 // pred_check
                _
              $region80: #{tpu_custom_call.1} parent=59 // pred_check_branch
                %1565 = sbr.rel (0) target = $region82
              $region81: #{tpu_custom_call.1} parent=59 // pred_region
                %s1566 = sshrl.u32 %s1445, 5
                // While loop
                $region83: #{tpu_custom_call.1} parent=81 // loop_pre_header
                  _
                $region84: #{tpu_custom_call.1} parent=81 // loop_header
                  %s1568 = sphi 0, %s1570
                  %p1569 = scmp.ge.s32.totalorder %s1568, %s1566
                  %s1573 = sphi 0, %s1642
                  %s1574 = sphi %s1438, %s1645
                  %s1575 = sphi %s1449, %s1646
                $region85: #{tpu_custom_call.1} parent=81 // loop_header_branch
                  %1572 = sbr.rel (%p1569) target = $region89
                $region86: #{tpu_custom_call.1} parent=81 // loop_body
                  %v1576 = vld [vmem:[%s1574] sm:$0xff]
                  %1577 = vst [vmem:[%s1575] sm:$0xff] %v1576
                  %v1578 = vld [vmem:[%s1574 + $0x8] sm:$0xff]
                  %1579 = vst [vmem:[%s1575 + $0x8] sm:$0xff] %v1578
                  %v1580 = vld [vmem:[%s1574 + $0x10] sm:$0xff]
                  %1581 = vst [vmem:[%s1575 + $0x10] sm:$0xff] %v1580
                  %v1582 = vld [vmem:[%s1574 + $0x18] sm:$0xff]
                  %1583 = vst [vmem:[%s1575 + $0x18] sm:$0xff] %v1582
                  %v1584 = vld [vmem:[%s1574 + $0x20] sm:$0xff]
                  %1585 = vst [vmem:[%s1575 + $0x20] sm:$0xff] %v1584
                  %v1586 = vld [vmem:[%s1574 + $0x28] sm:$0xff]
                  %1587 = vst [vmem:[%s1575 + $0x28] sm:$0xff] %v1586
                  %v1588 = vld [vmem:[%s1574 + $0x30] sm:$0xff]
                  %1589 = vst [vmem:[%s1575 + $0x30] sm:$0xff] %v1588
                  %v1590 = vld [vmem:[%s1574 + $0x38] sm:$0xff]
                  %1591 = vst [vmem:[%s1575 + $0x38] sm:$0xff] %v1590
                  %v1592 = vld [vmem:[%s1574 + $0x40] sm:$0xff]
                  %1593 = vst [vmem:[%s1575 + $0x40] sm:$0xff] %v1592
                  %v1594 = vld [vmem:[%s1574 + $0x48] sm:$0xff]
                  %1595 = vst [vmem:[%s1575 + $0x48] sm:$0xff] %v1594
                  %v1596 = vld [vmem:[%s1574 + $0x50] sm:$0xff]
                  %1597 = vst [vmem:[%s1575 + $0x50] sm:$0xff] %v1596
                  %v1598 = vld [vmem:[%s1574 + $0x58] sm:$0xff]
                  %1599 = vst [vmem:[%s1575 + $0x58] sm:$0xff] %v1598
                  %v1600 = vld [vmem:[%s1574 + $0x60] sm:$0xff]
                  %1601 = vst [vmem:[%s1575 + $0x60] sm:$0xff] %v1600
                  %v1602 = vld [vmem:[%s1574 + $0x68] sm:$0xff]
                  %1603 = vst [vmem:[%s1575 + $0x68] sm:$0xff] %v1602
                  %v1604 = vld [vmem:[%s1574 + $0x70] sm:$0xff]
                  %1605 = vst [vmem:[%s1575 + $0x70] sm:$0xff] %v1604
                  %v1606 = vld [vmem:[%s1574 + $0x78] sm:$0xff]
                  %1607 = vst [vmem:[%s1575 + $0x78] sm:$0xff] %v1606
                  %v1608 = vld [vmem:[%s1574 + $0x80] sm:$0xff]
                  %1609 = vst [vmem:[%s1575 + $0x80] sm:$0xff] %v1608
                  %v1610 = vld [vmem:[%s1574 + $0x88] sm:$0xff]
                  %1611 = vst [vmem:[%s1575 + $0x88] sm:$0xff] %v1610
                  %v1612 = vld [vmem:[%s1574 + $0x90] sm:$0xff]
                  %1613 = vst [vmem:[%s1575 + $0x90] sm:$0xff] %v1612
                  %v1614 = vld [vmem:[%s1574 + $0x98] sm:$0xff]
                  %1615 = vst [vmem:[%s1575 + $0x98] sm:$0xff] %v1614
                  %v1616 = vld [vmem:[%s1574 + $0xa0] sm:$0xff]
                  %1617 = vst [vmem:[%s1575 + $0xa0] sm:$0xff] %v1616
                  %v1618 = vld [vmem:[%s1574 + $0xa8] sm:$0xff]
                  %1619 = vst [vmem:[%s1575 + $0xa8] sm:$0xff] %v1618
                  %v1620 = vld [vmem:[%s1574 + $0xb0] sm:$0xff]
                  %1621 = vst [vmem:[%s1575 + $0xb0] sm:$0xff] %v1620
                  %v1622 = vld [vmem:[%s1574 + $0xb8] sm:$0xff]
                  %1623 = vst [vmem:[%s1575 + $0xb8] sm:$0xff] %v1622
                  %v1624 = vld [vmem:[%s1574 + $0xc0] sm:$0xff]
                  %1625 = vst [vmem:[%s1575 + $0xc0] sm:$0xff] %v1624
                  %v1626 = vld [vmem:[%s1574 + $0xc8] sm:$0xff]
                  %1627 = vst [vmem:[%s1575 + $0xc8] sm:$0xff] %v1626
                  %v1628 = vld [vmem:[%s1574 + $0xd0] sm:$0xff]
                  %1629 = vst [vmem:[%s1575 + $0xd0] sm:$0xff] %v1628
                  %v1630 = vld [vmem:[%s1574 + $0xd8] sm:$0xff]
                  %1631 = vst [vmem:[%s1575 + $0xd8] sm:$0xff] %v1630
                  %v1632 = vld [vmem:[%s1574 + $0xe0] sm:$0xff]
                  %1633 = vst [vmem:[%s1575 + $0xe0] sm:$0xff] %v1632
                  %v1634 = vld [vmem:[%s1574 + $0xe8] sm:$0xff]
                  %1635 = vst [vmem:[%s1575 + $0xe8] sm:$0xff] %v1634
                  %v1636 = vld [vmem:[%s1574 + $0xf0] sm:$0xff]
                  %1637 = vst [vmem:[%s1575 + $0xf0] sm:$0xff] %v1636
                  %v1638 = vld [vmem:[%s1574 + $0xf8] sm:$0xff]
                  %1639 = vst [vmem:[%s1575 + $0xf8] sm:$0xff] %v1638
                  %s1640 = sadd.s32 1, %s1573
                  %p1641 = scmp.ge.s32.totalorder %s1640, %s1566
                  %s1642 = scalar_select %p1641, 0, %s1640
                  %s1643 = smul.u32 %s1642, 256
                  %s1644 = smul.u32 %s1642, 256
                  %s1645 = scalar_lea.vmem %s1438, %s1643 [#allocation3]
                  %s1646 = scalar_lea.vmem %s1449, %s1644
                $region87: #{tpu_custom_call.1} parent=81 // loop_footer
                  %s1570 = sadd.s32 %s1568, 1
                $region88: #{tpu_custom_call.1} parent=81 // loop_footer_branch
                  %1567 = sbr.rel target = $region84
                $region89: #{tpu_custom_call.1} parent=81 // loop_exit
                  _
                %s1647 = sshrl.u32 %s1445, 5
                %s1648 = sand.u32 %s1445, 31
                %s1649 = smul.u32 %s1647, 32
                %s1650 = smul.u32 8, %s1649
                %s1651 = scalar_lea.vmem %s1438, %s1650 [#allocation3]
                %s1652 = smul.u32 8, %s1649
                %s1653 = scalar_lea.vmem %s1449, %s1652
                // While loop
                $region90: #{tpu_custom_call.1} parent=81 // loop_pre_header
                  _
                $region91: #{tpu_custom_call.1} parent=81 // loop_header
                  %s1655 = sphi 0, %s1657
                  %p1656 = scmp.ge.s32.totalorder %s1655, %s1648
                  %s1660 = sphi 0, %s1667
                  %s1661 = sphi %s1651, %s1670
                  %s1662 = sphi %s1653, %s1671
                $region92: #{tpu_custom_call.1} parent=81 // loop_header_branch
                  %1659 = sbr.rel (%p1656) target = $region96
                $region93: #{tpu_custom_call.1} parent=81 // loop_body
                  %v1663 = vld [vmem:[%s1661] sm:$0xff]
                  %1664 = vst [vmem:[%s1662] sm:$0xff] %v1663
                  %s1665 = sadd.s32 1, %s1660
                  %p1666 = scmp.ge.s32.totalorder %s1665, %s1648
                  %s1667 = scalar_select %p1666, 0, %s1665
                  %s1668 = smul.u32 %s1667, 8
                  %s1669 = smul.u32 %s1667, 8
                  %s1670 = scalar_lea.vmem %s1651, %s1668 [#allocation3]
                  %s1671 = scalar_lea.vmem %s1653, %s1669
                $region94: #{tpu_custom_call.1} parent=81 // loop_footer
                  %s1657 = sadd.s32 %s1655, 1
                $region95: #{tpu_custom_call.1} parent=81 // loop_footer_branch
                  %1654 = sbr.rel target = $region91
                $region96: #{tpu_custom_call.1} parent=81 // loop_exit
                  _
              $region82: #{tpu_custom_call.1} parent=59 // pred_fallthru
                _
              // Predicated region
              $region97: #{tpu_custom_call.1} parent=59 // pred_check
                _
              $region98: #{tpu_custom_call.1} parent=59 // pred_check_branch
                %1673 = sbr.rel target = $region100
              $region99: #{tpu_custom_call.1} parent=59 // pred_region
                _
              $region100: #{tpu_custom_call.1} parent=59 // pred_fallthru
                _
            $region60: #{tpu_custom_call.1} parent=55 // pred_fallthru
              _
            // Predicated region
            $region61: #{tpu_custom_call.1} parent=55 // pred_check
              _
            $region62: #{tpu_custom_call.1} parent=55 // pred_check_branch
              %1456 = sbr.rel target = $region64
            $region63: #{tpu_custom_call.1} parent=55 // pred_region
              %s1458 = sshrl.u32 %s1445, 5
              // While loop
              $region65: #{tpu_custom_call.1} parent=63 // loop_pre_header
                _
              $region66: #{tpu_custom_call.1} parent=63 // loop_header
                %s1460 = sphi 0, %s1462
                %p1461 = scmp.ge.s32.totalorder %s1460, %s1458
                %s1465 = sphi 0, %s1534
                %s1466 = sphi %s1438, %s1537
                %s1467 = sphi %s1449, %s1538
              $region67: #{tpu_custom_call.1} parent=63 // loop_header_branch
                %1464 = sbr.rel (%p1461) target = $region71
              $region68: #{tpu_custom_call.1} parent=63 // loop_body
                %v1468 = vld [vmem:[%s1466] sm:$0xff]
                %1469 = vst [vmem:[%s1467] sm:$0xff] %v1468
                %v1470 = vld [vmem:[%s1466 + $0x8] sm:$0xff]
                %1471 = vst [vmem:[%s1467 + $0x8] sm:$0xff] %v1470
                %v1472 = vld [vmem:[%s1466 + $0x10] sm:$0xff]
                %1473 = vst [vmem:[%s1467 + $0x10] sm:$0xff] %v1472
                %v1474 = vld [vmem:[%s1466 + $0x18] sm:$0xff]
                %1475 = vst [vmem:[%s1467 + $0x18] sm:$0xff] %v1474
                %v1476 = vld [vmem:[%s1466 + $0x20] sm:$0xff]
                %1477 = vst [vmem:[%s1467 + $0x20] sm:$0xff] %v1476
                %v1478 = vld [vmem:[%s1466 + $0x28] sm:$0xff]
                %1479 = vst [vmem:[%s1467 + $0x28] sm:$0xff] %v1478
                %v1480 = vld [vmem:[%s1466 + $0x30] sm:$0xff]
                %1481 = vst [vmem:[%s1467 + $0x30] sm:$0xff] %v1480
                %v1482 = vld [vmem:[%s1466 + $0x38] sm:$0xff]
                %1483 = vst [vmem:[%s1467 + $0x38] sm:$0xff] %v1482
                %v1484 = vld [vmem:[%s1466 + $0x40] sm:$0xff]
                %1485 = vst [vmem:[%s1467 + $0x40] sm:$0xff] %v1484
                %v1486 = vld [vmem:[%s1466 + $0x48] sm:$0xff]
                %1487 = vst [vmem:[%s1467 + $0x48] sm:$0xff] %v1486
                %v1488 = vld [vmem:[%s1466 + $0x50] sm:$0xff]
                %1489 = vst [vmem:[%s1467 + $0x50] sm:$0xff] %v1488
                %v1490 = vld [vmem:[%s1466 + $0x58] sm:$0xff]
                %1491 = vst [vmem:[%s1467 + $0x58] sm:$0xff] %v1490
                %v1492 = vld [vmem:[%s1466 + $0x60] sm:$0xff]
                %1493 = vst [vmem:[%s1467 + $0x60] sm:$0xff] %v1492
                %v1494 = vld [vmem:[%s1466 + $0x68] sm:$0xff]
                %1495 = vst [vmem:[%s1467 + $0x68] sm:$0xff] %v1494
                %v1496 = vld [vmem:[%s1466 + $0x70] sm:$0xff]
                %1497 = vst [vmem:[%s1467 + $0x70] sm:$0xff] %v1496
                %v1498 = vld [vmem:[%s1466 + $0x78] sm:$0xff]
                %1499 = vst [vmem:[%s1467 + $0x78] sm:$0xff] %v1498
                %v1500 = vld [vmem:[%s1466 + $0x80] sm:$0xff]
                %1501 = vst [vmem:[%s1467 + $0x80] sm:$0xff] %v1500
                %v1502 = vld [vmem:[%s1466 + $0x88] sm:$0xff]
                %1503 = vst [vmem:[%s1467 + $0x88] sm:$0xff] %v1502
                %v1504 = vld [vmem:[%s1466 + $0x90] sm:$0xff]
                %1505 = vst [vmem:[%s1467 + $0x90] sm:$0xff] %v1504
                %v1506 = vld [vmem:[%s1466 + $0x98] sm:$0xff]
                %1507 = vst [vmem:[%s1467 + $0x98] sm:$0xff] %v1506
                %v1508 = vld [vmem:[%s1466 + $0xa0] sm:$0xff]
                %1509 = vst [vmem:[%s1467 + $0xa0] sm:$0xff] %v1508
                %v1510 = vld [vmem:[%s1466 + $0xa8] sm:$0xff]
                %1511 = vst [vmem:[%s1467 + $0xa8] sm:$0xff] %v1510
                %v1512 = vld [vmem:[%s1466 + $0xb0] sm:$0xff]
                %1513 = vst [vmem:[%s1467 + $0xb0] sm:$0xff] %v1512
                %v1514 = vld [vmem:[%s1466 + $0xb8] sm:$0xff]
                %1515 = vst [vmem:[%s1467 + $0xb8] sm:$0xff] %v1514
                %v1516 = vld [vmem:[%s1466 + $0xc0] sm:$0xff]
                %1517 = vst [vmem:[%s1467 + $0xc0] sm:$0xff] %v1516
                %v1518 = vld [vmem:[%s1466 + $0xc8] sm:$0xff]
                %1519 = vst [vmem:[%s1467 + $0xc8] sm:$0xff] %v1518
                %v1520 = vld [vmem:[%s1466 + $0xd0] sm:$0xff]
                %1521 = vst [vmem:[%s1467 + $0xd0] sm:$0xff] %v1520
                %v1522 = vld [vmem:[%s1466 + $0xd8] sm:$0xff]
                %1523 = vst [vmem:[%s1467 + $0xd8] sm:$0xff] %v1522
                %v1524 = vld [vmem:[%s1466 + $0xe0] sm:$0xff]
                %1525 = vst [vmem:[%s1467 + $0xe0] sm:$0xff] %v1524
                %v1526 = vld [vmem:[%s1466 + $0xe8] sm:$0xff]
                %1527 = vst [vmem:[%s1467 + $0xe8] sm:$0xff] %v1526
                %v1528 = vld [vmem:[%s1466 + $0xf0] sm:$0xff]
                %1529 = vst [vmem:[%s1467 + $0xf0] sm:$0xff] %v1528
                %v1530 = vld [vmem:[%s1466 + $0xf8] sm:$0xff]
                %1531 = vst [vmem:[%s1467 + $0xf8] sm:$0xff] %v1530
                %s1532 = sadd.s32 1, %s1465
                %p1533 = scmp.ge.s32.totalorder %s1532, %s1458
                %s1534 = scalar_select %p1533, 0, %s1532
                %s1535 = smul.u32 %s1534, 256
                %s1536 = smul.u32 %s1534, 256
                %s1537 = scalar_lea.vmem %s1438, %s1535 [#allocation3]
                %s1538 = scalar_lea.vmem %s1449, %s1536
              $region69: #{tpu_custom_call.1} parent=63 // loop_footer
                %s1462 = sadd.s32 %s1460, 1
              $region70: #{tpu_custom_call.1} parent=63 // loop_footer_branch
                %1459 = sbr.rel target = $region66
              $region71: #{tpu_custom_call.1} parent=63 // loop_exit
                _
              %s1539 = sshrl.u32 %s1445, 5
              %s1540 = sand.u32 %s1445, 31
              %s1541 = smul.u32 %s1539, 32
              %s1542 = smul.u32 8, %s1541
              %s1543 = scalar_lea.vmem %s1438, %s1542 [#allocation3]
              %s1544 = smul.u32 8, %s1541
              %s1545 = scalar_lea.vmem %s1449, %s1544
              // While loop
              $region72: #{tpu_custom_call.1} parent=63 // loop_pre_header
                _
              $region73: #{tpu_custom_call.1} parent=63 // loop_header
                %s1547 = sphi 0, %s1549
                %p1548 = scmp.ge.s32.totalorder %s1547, %s1540
                %s1552 = sphi 0, %s1559
                %s1553 = sphi %s1543, %s1562
                %s1554 = sphi %s1545, %s1563
              $region74: #{tpu_custom_call.1} parent=63 // loop_header_branch
                %1551 = sbr.rel (%p1548) target = $region78
              $region75: #{tpu_custom_call.1} parent=63 // loop_body
                %v1555 = vld [vmem:[%s1553] sm:$0xff]
                %1556 = vst [vmem:[%s1554] sm:$0xff] %v1555
                %s1557 = sadd.s32 1, %s1552
                %p1558 = scmp.ge.s32.totalorder %s1557, %s1540
                %s1559 = scalar_select %p1558, 0, %s1557
                %s1560 = smul.u32 %s1559, 8
                %s1561 = smul.u32 %s1559, 8
                %s1562 = scalar_lea.vmem %s1543, %s1560 [#allocation3]
                %s1563 = scalar_lea.vmem %s1545, %s1561
              $region76: #{tpu_custom_call.1} parent=63 // loop_footer
                %s1549 = sadd.s32 %s1547, 1
              $region77: #{tpu_custom_call.1} parent=63 // loop_footer_branch
                %1546 = sbr.rel target = $region73
              $region78: #{tpu_custom_call.1} parent=63 // loop_exit
                _
            $region64: #{tpu_custom_call.1} parent=55 // pred_fallthru
              _
          $region56: #{tpu_custom_call.1} parent=51 // pred_fallthru
            _
          %1674 = vnop
        $region52: #{tpu_custom_call.1} parent=47 // pred_fallthru
          _
      $region48: #{tpu_custom_call.1} parent=5 // pred_fallthru
        _
      %p1675 = scmp.le.s32.totalorder 2, %s15
      // Predicated region
      $region101: #{tpu_custom_call.1} parent=5 // pred_check
        %p1676 = pneg %p1675
      $region102: #{tpu_custom_call.1} parent=5 // pred_check_branch
        %1678 = sbr.rel (%p1676) target = $region104
      $region103: #{tpu_custom_call.1} parent=5 // pred_region
        %s1679 = ssub.s32 %s15, 2
        // Predicated region
        $region105: #{tpu_custom_call.1} parent=103 // pred_check
          %p1680 = pneg %p196
        $region106: #{tpu_custom_call.1} parent=103 // pred_check_branch
          %1682 = sbr.rel (%p1680) target = $region108
        $region107: #{tpu_custom_call.1} parent=103 // pred_region
          %s1683 = sand.u32 %s181, 1
          %s1684 = sand.u32 %s181, 1
          %s1685 = smul.addr %s1684, 256
          %s1686 = scalar_lea.vmem [#allocation3], %s1685
        $region108: #{tpu_custom_call.1} parent=103 // pred_fallthru
          _
      $region104: #{tpu_custom_call.1} parent=5 // pred_fallthru
        _
    $region6: #{tpu_custom_call.1} parent=1 // loop_footer
      %s19 = sadd.s32 1, %s15
    $region7: #{tpu_custom_call.1} parent=1 // loop_footer_branch
      %14 = sbr.rel target = $region3
    $region8: #{tpu_custom_call.1} parent=1 // loop_exit
      _

</llo_original>
